<compile_context>
chip_gen: v7x
topology: tpu7x:2x2x1
jax: 0.10.0
libtpu: 0.0.40
codegen_flags: <defaults>
</compile_context>

<pallas_src>
import jax
import jax.numpy as jnp
from jax import lax
from jax.experimental import pallas as pl
from jax.experimental.pallas import tpu as pltpu

LN_EPS = 1e-5  # torch.nn.LayerNorm default

# Squeezed size-1 block dim (older Pallas accepts None for the same thing).
_SQ = pl.Squeezed() if hasattr(pl, "Squeezed") else None


def _round_up(x, m):
    return ((x + m - 1) // m) * m


def _cdiv(a, b):
    return (a + b - 1) // b


def _layernorm(x):
    # single pass: var = E[x^2] - mean^2 (both reductions independent -> ILP)
    mean = jnp.mean(x, axis=-1, keepdims=True)
    msq = jnp.mean(jnp.square(x), axis=-1, keepdims=True)
    var = jnp.maximum(msq - jnp.square(mean), 0.0)
    return (x - mean) * lax.rsqrt(var + LN_EPS)


def _gelu_exact(x):
    # matches F.gelu(..., approximate='none'); kept exact for module parity.
    # TODO(synk): tanh-approx GELU would move this work from VALU to the idle EUP.
    return 0.5 * x * (1.0 + lax.erf(x * jnp.float32(0.7071067811865476)))


# ----------------------------- Pallas kernel ------------------------------ #

def _mixer_kernel(btid_ref, x_ref, ln_ref, w1a_ref, w1b_ref, w2at_ref, w2bt_ref,
                  o_ref, acc_ref):
    del btid_ref                                # consumed by the index_maps only
    l = pl.program_id(1)                        # layer index (innermost grid axis)
    Bt, N, D = x_ref.shape
    wdt = w1a_ref.dtype                         # MXU operand dtype (bf16 default)

    @pl.when(l == 0)
    def _():                                    # layer 0: load this block's input
        acc_ref[...] = x_ref[...].astype(jnp.float32)

    x = acc_ref[...]                            # (Bt, N, D) f32, resident across layers

    g1 = ln_ref[0:1, :]
    b1 = ln_ref[1:2, :]
    g2 = ln_ref[2:3, :]
    b2 = ln_ref[3:4, :]

    # --- block 1: token mixing (ConditionalLinear axis=1), batched over Bt ---
    y = (g1 * _layernorm(x) + b1).astype(wdt)                        # (Bt, N, D)
    w1a = jnp.broadcast_to(w1a_ref[...], (Bt,) + w1a_ref.shape)      # (Bt, H1p, N)
    h = jnp.einsum('bhn,bnd->bhd', w1a, y,
                   preferred_element_type=jnp.float32)               # (Bt, H1p, D)
    h = _gelu_exact(h).astype(wdt)
    w1b = jnp.broadcast_to(w1b_ref[...], (Bt,) + w1b_ref.shape)      # (Bt, N, H1p)
    x1 = x + jnp.einsum('bnh,bhd->bnd', w1b, h,
                        preferred_element_type=jnp.float32)          # (Bt, N, D)

    # --- block 2: channel mixing (axis=2) as one (Bt*N, D) @ (D, H2p) matmul ---
    y2 = (g2 * _layernorm(x1) + b2).astype(wdt).reshape(Bt * N, D)
    h2 = jnp.dot(y2, w2at_ref[...], preferred_element_type=jnp.float32)   # (Bt*N, H2p)
    h2 = _gelu_exact(h2).astype(wdt)
    t2 = jnp.dot(h2, w2bt_ref[...], preferred_element_type=jnp.float32)   # (Bt*N, D)
    x2 = x1 + t2.reshape(Bt, N, D)

    acc_ref[...] = x2                           # feeds the next layer (VMEM-resident)
    o_ref[...] = x2.astype(o_ref.dtype)         # written back to HBM when blk changes


def _mixer_pallas(x_packed, block_tid, kp, Bt):
    """x_packed: (n_blocks*Bt, N, D) f32;  block_tid: (n_blocks,) int32."""
    BP, N, D = x_packed.shape
    n_blocks = BP // Bt
    depth, n_emb = kp["depth"], kp["n_emb"]
    H1p = kp["w1a"].shape[1]
    H2p = kp["w2at"].shape[2]
    wbytes = jnp.dtype(kp["w1a"].dtype).itemsize

    def act_spec():
        return pl.BlockSpec((Bt, N, D), lambda blk, l, tid: (blk, 0, 0))

    def weight_spec(d1, d2):
        # per-(layer, task) tile; tile index repeats across steps when the task
        # repeats (or use_conditioning=False), so it stays VMEM-resident.
        return pl.BlockSpec((_SQ, d1, d2),
                            lambda blk, l, tid: (l * n_emb + tid[blk], 0, 0))

    # Explicit VMEM budget (double-buffered blocks + scratch + slack); v7x has
    # only 64 MiB physical VMEM so keep the cap well below it.
    blk_bytes = (2 * Bt * N * D * 4 + 4 * D * 4
                 + (H1p * N + N * H1p + D * H2p + H2p * D) * wbytes)
    vmem_budget = int(min(max(4 * blk_bytes + (2 << 20), 4 << 20), 48 << 20))

    return pl.pallas_call(
        _mixer_kernel,
        out_shape=jax.ShapeDtypeStruct((BP, N, D), x_packed.dtype),
        grid_spec=pltpu.PrefetchScalarGridSpec(
            num_scalar_prefetch=1,            # block_tid -> SMEM, drives index_maps
            grid=(n_blocks, depth),           # layer axis innermost (activation resident)
            in_specs=[
                act_spec(),                   # x
                weight_spec(4, D),            # [gamma1; beta1; gamma2; beta2]
                weight_spec(H1p, N),          # W1a   (token-mix dense_1)
                weight_spec(N, H1p),          # W1b   (token-mix dense_2)
                weight_spec(D, H2p),          # W2a^T (channel-mix dense_1)
                weight_spec(H2p, D),          # W2b^T (channel-mix dense_2)
            ],
            out_specs=act_spec(),
            scratch_shapes=[pltpu.VMEM((Bt, N, D), jnp.float32)],
        ),
        compiler_params=pltpu.CompilerParams(
            dimension_semantics=("parallel", "arbitrary"),
            vmem_limit_bytes=vmem_budget),
    )(block_tid, x_packed, kp["ln"], kp["w1a"], kp["w1b"], kp["w2at"], kp["w2bt"])


# ----------------------- batch packing (wrapper side) ---------------------- #

def _pack_batch(tid, n_emb, Bt):
    """Group batch items into task-homogeneous blocks of Bt items.

    Returns (gather_idx, slot_of, block_tid, n_blocks):
      gather_idx: (n_blocks*Bt,) original item feeding each packed slot (padded
                  slots point at item 0; their outputs are discarded),
      slot_of:    (B,) packed slot of each original item (for un-packing),
      block_tid:  (n_blocks,) task id of each block,
      n_blocks:   static worst-case block count.
    """
    B = tid.shape[0]
    n_blocks = min(_cdiv(B, Bt) + n_emb - 1, B)
    tid = jnp.clip(tid.astype(jnp.int32), 0, n_emb - 1)
    order = jnp.argsort(tid).astype(jnp.int32)          # sort batch by task
    sorted_tid = tid[order]
    counts = jnp.bincount(tid, length=n_emb)
    task_start = jnp.cumsum(counts) - counts            # exclusive prefix
    pos = jnp.arange(B, dtype=jnp.int32) - task_start[sorted_tid]
    blocks_per_task = -(-counts // Bt)                  # ceil
    block_start = jnp.cumsum(blocks_per_task) - blocks_per_task
    blk = (block_start[sorted_tid] + pos // Bt).astype(jnp.int32)
    slot = (blk * Bt + pos % Bt).astype(jnp.int32)
    gather_idx = jnp.zeros((n_blocks * Bt,), jnp.int32).at[slot].set(order)
    block_tid = jnp.zeros((n_blocks,), jnp.int32).at[blk].set(sorted_tid)
    slot_of = jnp.zeros((B,), jnp.int32).at[order].set(slot)
    return gather_idx, slot_of, block_tid, n_blocks


def mlp_mixer_forward(x, tasks_id, params, use_conditioning, block_batch=8):
    """MLPMixer forward (all depth layers) via the fused Pallas kernel."""
    B, N, D = x.shape
    kp = params["kernel"]
    tid = (tasks_id if use_conditioning
           else jnp.zeros_like(tasks_id)).astype(jnp.int32)
    Bt = max(1, min(B, block_batch))
    gather_idx, slot_of, block_tid, n_blocks = _pack_batch(tid, kp["n_emb"], Bt)
    x_packed = x[gather_idx]                            # (n_blocks*Bt, N, D)
    out_packed = _mixer_pallas(x_packed, block_tid, kp, Bt)
    return out_packed[slot_of]                          # (B, N, D), original order


# -------------------------- params construction ---------------------------- #

def init_params(key, seq_len, embed_dim, n_tasks, use_conditioning,
                expansion_factor=0.3, expansion_factor_token=0.3, depth=1,
                mxu_dtype=jnp.bfloat16):
    """Deterministic synthetic parameters matching the module's shapes.

    Returns raw per-layer weights (for the pure-JAX reference) plus kernel-ready
    arrays: all layers' per-task tensors concatenated along one (depth*n_emb)
    leading axis, channel-mix weights pre-transposed, inner dims padded to the
    sublane tile of mxu_dtype (exact: padded rows/cols are zero).
    """
    N, D = seq_len, embed_dim
    H1 = int(seq_len * expansion_factor)            # token-mix inner dim
    H2 = int(embed_dim * expansion_factor_token)    # channel-mix inner dim
    n_emb = n_tasks if use_conditioning else 1      # Embedding rows (Wrapper* use 1)
    sub = 8 * 4 // jnp.dtype(mxu_dtype).itemsize    # 8 (f32) / 16 (bf16) sublane tile
    H1p = _round_up(max(H1, 1), sub)
    H2p = _round_up(max(H2, 1), sub)

    layers = []
    ln_l, w1a_l, w1b_l, w2at_l, w2bt_l = [], [], [], [], []
    for _ in range(depth):
        key, *ks = jax.random.split(key, 7)
        # ConditionalLayerNorm embedding: gamma ~ N(1, 0.02), beta = 0
        ln1 = jnp.concatenate(
            [1.0 + 0.02 * jax.random.normal(ks[0], (n_emb, D)),
             jnp.zeros((n_emb, D))], axis=1).astype(jnp.float32)
        ln2 = jnp.concatenate(
            [1.0 + 0.02 * jax.random.normal(ks[1], (n_emb, D)),
             jnp.zeros((n_emb, D))], axis=1).astype(jnp.float32)

        # get_rnd_weight(...) is not shown in the source; deterministic
        # kaiming-style normal with the correct (n_emb, fout*fin) shapes.
        def rnd(k, fin, fout):
            return ((2.0 / fin) ** 0.5 *
                    jax.random.normal(k, (n_emb, fout * fin))).astype(jnp.float32)

        raw = dict(
            ln1=ln1, ln2=ln2,
            w1a=rnd(ks[2], N, H1),    # ConditionalLinear(fin=N,  fout=H1, axis=1)
            w1b=rnd(ks[3], H1, N),    # ConditionalLinear(fin=H1, fout=N,  axis=1)
            w2a=rnd(ks[4], D, H2),    # ConditionalLinear(fin=D,  fout=H2, axis=2)
            w2b=rnd(ks[5], H2, D),    # ConditionalLinear(fin=H2, fout=D,  axis=2)
        )
        layers.append(raw)

        ln_l.append(jnp.stack([ln1[:, :D], ln1[:, D:], ln2[:, :D], ln2[:, D:]],
                              axis=1))                                  # (n_emb, 4, D)
        w1a = raw["w1a"].reshape(n_emb, H1, N)
        w1a_l.append(jnp.pad(w1a, ((0, 0), (0, H1p - H1), (0, 0))))
        w1b = raw["w1b"].reshape(n_emb, N, H1)
        w1b_l.append(jnp.pad(w1b, ((0, 0), (0, 0), (0, H1p - H1))))
        w2at = jnp.swapaxes(raw["w2a"].reshape(n_emb, H2, D), 1, 2)     # (n_emb, D, H2)
        w2at_l.append(jnp.pad(w2at, ((0, 0), (0, 0), (0, H2p - H2))))
        w2bt = jnp.swapaxes(raw["w2b"].reshape(n_emb, D, H2), 1, 2)     # (n_emb, H2, D)
        w2bt_l.append(jnp.pad(w2bt, ((0, 0), (0, H2p - H2), (0, 0))))

    kernel = dict(
        ln=jnp.concatenate(ln_l, axis=0).astype(jnp.float32),   # (depth*n_emb, 4, D)
        w1a=jnp.concatenate(w1a_l, axis=0).astype(mxu_dtype),   # (depth*n_emb, H1p, N)
        w1b=jnp.concatenate(w1b_l, axis=0).astype(mxu_dtype),   # (depth*n_emb, N, H1p)
        w2at=jnp.concatenate(w2at_l, axis=0).astype(mxu_dtype), # (depth*n_emb, D, H2p)
        w2bt=jnp.concatenate(w2bt_l, axis=0).astype(mxu_dtype), # (depth*n_emb, H2p, D)
        n_emb=n_emb, depth=depth)
    return dict(layers=layers, kernel=kernel, H1=H1, H2=H2)


# ------------------------- pure-JAX reference ------------------------------ #

def mlp_mixer_reference(x, tasks_id, params, use_conditioning, seq_len, embed_dim):
    B = x.shape[0]
    H1, H2 = params["H1"], params["H2"]
    idx = (tasks_id if use_conditioning
           else jnp.zeros_like(tasks_id)).astype(jnp.int32)
    out = x
    for layer in params["layers"]:
        ln1 = layer["ln1"][idx]
        g1, b1 = ln1[:, :embed_dim], ln1[:, embed_dim:]
        ln2 = layer["ln2"][idx]
        g2, b2 = ln2[:, :embed_dim], ln2[:, embed_dim:]
        w1a = layer["w1a"][idx].reshape(B, H1, seq_len)
        w1b = layer["w1b"][idx].reshape(B, seq_len, H1)
        w2a = layer["w2a"][idx].reshape(B, H2, embed_dim)
        w2b = layer["w2b"][idx].reshape(B, embed_dim, H2)
        # block 1 (token mixing, axis=1)
        y = g1[:, None, :] * _layernorm(out) + b1[:, None, :]
        h = _gelu_exact(jnp.einsum('bnd,bcn->bcd', y, w1a))
        out = out + jnp.einsum('bnd,bcn->bcd', h, w1b)
        # block 2 (channel mixing, axis=2)
        y2 = g2[:, None, :] * _layernorm(out) + b2[:, None, :]
        h2 = _gelu_exact(jnp.einsum('bnd,bcd->bnc', y2, w2a))
        out = out + jnp.einsum('bnd,bcd->bnc', h2, w2b)
    return out


if __name__ == "__main__":
    B, N, D, n_tasks, depth = 2, 8, 32, 3, 2   # batch, seq_len, embed_dim, tasks, depth

    key = jax.random.PRNGKey(0)
    kx, kt, kp = jax.random.split(key, 3)
    x = jax.random.normal(kx, (B, N, D), dtype=jnp.float32)
    tasks_id = jax.random.randint(kt, (B,), 0, n_tasks)

    for use_conditioning in (True, False):
        for mxu_dtype, tol in ((jnp.float32, 1e-4), (jnp.bfloat16, 5e-2)):
            params = init_params(kp, N, D, n_tasks, use_conditioning,
                                 depth=depth, mxu_dtype=mxu_dtype)
            out = jax.block_until_ready(
                mlp_mixer_forward(x, tasks_id, params, use_conditioning))
            ref = mlp_mixer_reference(x, tasks_id, params, use_conditioning, N, D)
            assert out.shape == (B, N, D) and out.dtype == jnp.float32
            err = float(jnp.max(jnp.abs(out - ref)))
            scale = float(jnp.max(jnp.abs(ref)))
            assert err <= tol * max(scale, 1.0), (
                f"use_conditioning={use_conditioning} dtype={jnp.dtype(mxu_dtype).name} "
                f"max_abs_err={err} scale={scale}")
    print("KERNEL_OK")
</pallas_src>

<mosaic_0001>
module attributes {stable_mosaic.version = 11 : i64} {
  func.func @_mixer_kernel(%arg0: i32, %arg1: i32, %arg2: memref<2xi32, #tpu.memory_space<smem>>, %arg3: memref<2x8x32xf32, #tpu.memory_space<vmem>>, %arg4: memref<1x4x32xf32, #tpu.memory_space<vmem>>, %arg5: memref<1x8x8xf32, #tpu.memory_space<vmem>>, %arg6: memref<1x8x8xf32, #tpu.memory_space<vmem>>, %arg7: memref<1x32x16xf32, #tpu.memory_space<vmem>>, %arg8: memref<1x16x32xf32, #tpu.memory_space<vmem>>, %arg9: memref<2x8x32xf32, #tpu.memory_space<vmem>>, %arg10: memref<2x8x32xf32, #tpu.memory_space<vmem>>) attributes {dimension_semantics = [#tpu.dimension_semantics<parallel>, #tpu.dimension_semantics<arbitrary>], iteration_bounds = array<i64: 2, 2>, scalar_prefetch = 1 : i64, scratch_operands = 1 : i64, tpu.core_type = #tpu.core_type<tc>, window_params = [{transform_indices = @transform_0, window_bounds = array<i64: 2, 8, 32>}, {transform_indices = @transform_1, window_bounds = array<i64: 1, 4, 32>}, {transform_indices = @transform_2, window_bounds = array<i64: 1, 8, 8>}, {transform_indices = @transform_3, window_bounds = array<i64: 1, 8, 8>}, {transform_indices = @transform_4, window_bounds = array<i64: 1, 32, 16>}, {transform_indices = @transform_5, window_bounds = array<i64: 1, 16, 32>}, {transform_indices = @transform_6, window_bounds = array<i64: 2, 8, 32>}]} {
    %c0_i32 = arith.constant 0 : i32
    %0 = arith.cmpi eq, %arg1, %c0_i32 : i32
    %1 = arith.extui %0 : i1 to i32
    %c0_i32_0 = arith.constant 0 : i32
    %2 = arith.cmpi ne, %1, %c0_i32_0 : i32
    scf.if %2 {
      %c0_51 = arith.constant 0 : index
      %c0_52 = arith.constant 0 : index
      %c0_53 = arith.constant 0 : index
      %102 = vector.load %arg3[%c0_51, %c0_52, %c0_53] : memref<2x8x32xf32, #tpu.memory_space<vmem>>, vector<2x8x32xf32>
      %c0_54 = arith.constant 0 : index
      %c0_55 = arith.constant 0 : index
      %c0_56 = arith.constant 0 : index
      %103 = vector.load %arg10[%c0_54, %c0_55, %c0_56] : memref<2x8x32xf32, #tpu.memory_space<vmem>>, vector<2x8x32xf32>
      tpu.vector_store %arg10[%c0_54, %c0_55, %c0_56], %102 {strides = array<i32>} : memref<2x8x32xf32, #tpu.memory_space<vmem>>, vector<2x8x32xf32>,
    } else {
    }
    %c0 = arith.constant 0 : index
    %c0_1 = arith.constant 0 : index
    %c0_2 = arith.constant 0 : index
    %3 = vector.load %arg10[%c0, %c0_1, %c0_2] : memref<2x8x32xf32, #tpu.memory_space<vmem>>, vector<2x8x32xf32>
    %c0_3 = arith.constant 0 : index
    %c0_4 = arith.constant 0 : index
    %c0_5 = arith.constant 0 : index
    %4 = vector.load %arg4[%c0_3, %c0_4, %c0_5] : memref<1x4x32xf32, #tpu.memory_space<vmem>>, vector<1x1x32xf32>
    %5 = vector.shape_cast %4 : vector<1x1x32xf32> to vector<1x32xf32>
    %c0_6 = arith.constant 0 : index
    %c1 = arith.constant 1 : index
    %c0_7 = arith.constant 0 : index
    %6 = vector.load %arg4[%c0_6, %c1, %c0_7] : memref<1x4x32xf32, #tpu.memory_space<vmem>>, vector<1x1x32xf32>
    %7 = vector.shape_cast %6 : vector<1x1x32xf32> to vector<1x32xf32>
    %c0_8 = arith.constant 0 : index
    %c2 = arith.constant 2 : index
    %c0_9 = arith.constant 0 : index
    %8 = vector.load %arg4[%c0_8, %c2, %c0_9] : memref<1x4x32xf32, #tpu.memory_space<vmem>>, vector<1x1x32xf32>
    %9 = vector.shape_cast %8 : vector<1x1x32xf32> to vector<1x32xf32>
    %c0_10 = arith.constant 0 : index
    %c3 = arith.constant 3 : index
    %c0_11 = arith.constant 0 : index
    %10 = vector.load %arg4[%c0_10, %c3, %c0_11] : memref<1x4x32xf32, #tpu.memory_space<vmem>>, vector<1x1x32xf32>
    %11 = vector.shape_cast %10 : vector<1x1x32xf32> to vector<1x32xf32>
    %cst = arith.constant dense<0.000000e+00> : vector<2x8xf32>
    %12 = vector.multi_reduction <add>, %3, %cst [2] : vector<2x8x32xf32> to vector<2x8xf32>
    %13 = vector.shape_cast %12 : vector<2x8xf32> to vector<2x8x1xf32>
    %cst_12 = arith.constant 3.200000e+01 : f32
    %14 = vector.broadcast %cst_12 : f32 to vector<2x8x1xf32>
    %15 = arith.divf %13, %14 : vector<2x8x1xf32>
    %16 = arith.mulf %3, %3 : vector<2x8x32xf32>
    %cst_13 = arith.constant dense<0.000000e+00> : vector<2x8xf32>
    %17 = vector.multi_reduction <add>, %16, %cst_13 [2] : vector<2x8x32xf32> to vector<2x8xf32>
    %18 = vector.shape_cast %17 : vector<2x8xf32> to vector<2x8x1xf32>
    %cst_14 = arith.constant 3.200000e+01 : f32
    %19 = vector.broadcast %cst_14 : f32 to vector<2x8x1xf32>
    %20 = arith.divf %18, %19 : vector<2x8x1xf32>
    %21 = arith.mulf %15, %15 : vector<2x8x1xf32>
    %22 = arith.subf %20, %21 : vector<2x8x1xf32>
    %cst_15 = arith.constant 0.000000e+00 : f32
    %23 = vector.broadcast %cst_15 : f32 to vector<2x8x1xf32>
    %24 = arith.maximumf %22, %23 : vector<2x8x1xf32>
    %25 = vector.broadcast %15 : vector<2x8x1xf32> to vector<2x8x32xf32>
    %26 = arith.subf %3, %25 : vector<2x8x32xf32>
    %cst_16 = arith.constant 9.99999974E-6 : f32
    %27 = vector.broadcast %cst_16 : f32 to vector<2x8x1xf32>
    %28 = arith.addf %24, %27 : vector<2x8x1xf32>
    %29 = math.rsqrt %28 : vector<2x8x1xf32>
    %30 = vector.broadcast %29 : vector<2x8x1xf32> to vector<2x8x32xf32>
    %31 = arith.mulf %26, %30 : vector<2x8x32xf32>
    %32 = vector.shape_cast %5 : vector<1x32xf32> to vector<1x1x32xf32>
    %33 = vector.broadcast %32 : vector<1x1x32xf32> to vector<2x8x32xf32>
    %34 = arith.mulf %33, %31 : vector<2x8x32xf32>
    %35 = vector.shape_cast %7 : vector<1x32xf32> to vector<1x1x32xf32>
    %36 = vector.broadcast %35 : vector<1x1x32xf32> to vector<2x8x32xf32>
    %37 = arith.addf %34, %36 : vector<2x8x32xf32>
    %c0_17 = arith.constant 0 : index
    %c0_18 = arith.constant 0 : index
    %c0_19 = arith.constant 0 : index
    %38 = vector.load %arg5[%c0_17, %c0_18, %c0_19] : memref<1x8x8xf32, #tpu.memory_space<vmem>>, vector<1x8x8xf32>
    %39 = vector.shape_cast %38 : vector<1x8x8xf32> to vector<8x8xf32>
    %40 = vector.shape_cast %39 : vector<8x8xf32> to vector<1x8x8xf32>
    %41 = vector.broadcast %40 : vector<1x8x8xf32> to vector<2x8x8xf32>
    "tpu.trace_start"() <{level = 10 : i32, message = "bhn,bnd->bhd"}> : () -> ()
    %cst_20 = arith.constant dense<0.000000e+00> : vector<2x8x32xf32>
    %42 = tpu.matmul %41, %37, %cst_20 {dimension_numbers = #tpu.dot_dimension_numbers<[2], [1], [1], [2], [0, 0, 0, 1, 1, 2], [0], [0]>} : vector<2x8x8xf32>, vector<2x8x32xf32>, vector<2x8x32xf32> -> vector<2x8x32xf32>
    "tpu.trace_stop"() : () -> ()
    %cst_21 = arith.constant 5.000000e-01 : f32
    %43 = vector.broadcast %cst_21 : f32 to vector<2x8x32xf32>
    %44 = arith.mulf %43, %42 : vector<2x8x32xf32>
    %cst_22 = arith.constant 0.707106769 : f32
    %45 = vector.broadcast %cst_22 : f32 to vector<2x8x32xf32>
    %46 = arith.mulf %42, %45 : vector<2x8x32xf32>
    %47 = math.erf %46 : vector<2x8x32xf32>
    %cst_23 = arith.constant 1.000000e+00 : f32
    %48 = vector.broadcast %cst_23 : f32 to vector<2x8x32xf32>
    %49 = arith.addf %48, %47 : vector<2x8x32xf32>
    %50 = arith.mulf %44, %49 : vector<2x8x32xf32>
    %c0_24 = arith.constant 0 : index
    %c0_25 = arith.constant 0 : index
    %c0_26 = arith.constant 0 : index
    %51 = vector.load %arg6[%c0_24, %c0_25, %c0_26] : memref<1x8x8xf32, #tpu.memory_space<vmem>>, vector<1x8x8xf32>
    %52 = vector.shape_cast %51 : vector<1x8x8xf32> to vector<8x8xf32>
    %53 = vector.shape_cast %52 : vector<8x8xf32> to vector<1x8x8xf32>
    %54 = vector.broadcast %53 : vector<1x8x8xf32> to vector<2x8x8xf32>
    "tpu.trace_start"() <{level = 10 : i32, message = "bnh,bhd->bnd"}> : () -> ()
    %cst_27 = arith.constant dense<0.000000e+00> : vector<2x8x32xf32>
    %55 = tpu.matmul %54, %50, %cst_27 {dimension_numbers = #tpu.dot_dimension_numbers<[2], [1], [1], [2], [0, 0, 0, 1, 1, 2], [0], [0]>} : vector<2x8x8xf32>, vector<2x8x32xf32>, vector<2x8x32xf32> -> vector<2x8x32xf32>
    "tpu.trace_stop"() : () -> ()
    %56 = arith.addf %3, %55 : vector<2x8x32xf32>
    %cst_28 = arith.constant dense<0.000000e+00> : vector<2x8xf32>
    %57 = vector.multi_reduction <add>, %56, %cst_28 [2] : vector<2x8x32xf32> to vector<2x8xf32>
    %58 = vector.shape_cast %57 : vector<2x8xf32> to vector<2x8x1xf32>
    %cst_29 = arith.constant 3.200000e+01 : f32
    %59 = vector.broadcast %cst_29 : f32 to vector<2x8x1xf32>
    %60 = arith.divf %58, %59 : vector<2x8x1xf32>
    %61 = arith.mulf %56, %56 : vector<2x8x32xf32>
    %cst_30 = arith.constant dense<0.000000e+00> : vector<2x8xf32>
    %62 = vector.multi_reduction <add>, %61, %cst_30 [2] : vector<2x8x32xf32> to vector<2x8xf32>
    %63 = vector.shape_cast %62 : vector<2x8xf32> to vector<2x8x1xf32>
    %cst_31 = arith.constant 3.200000e+01 : f32
    %64 = vector.broadcast %cst_31 : f32 to vector<2x8x1xf32>
    %65 = arith.divf %63, %64 : vector<2x8x1xf32>
    %66 = arith.mulf %60, %60 : vector<2x8x1xf32>
    %67 = arith.subf %65, %66 : vector<2x8x1xf32>
    %cst_32 = arith.constant 0.000000e+00 : f32
    %68 = vector.broadcast %cst_32 : f32 to vector<2x8x1xf32>
    %69 = arith.maximumf %67, %68 : vector<2x8x1xf32>
    %70 = vector.broadcast %60 : vector<2x8x1xf32> to vector<2x8x32xf32>
    %71 = arith.subf %56, %70 : vector<2x8x32xf32>
    %cst_33 = arith.constant 9.99999974E-6 : f32
    %72 = vector.broadcast %cst_33 : f32 to vector<2x8x1xf32>
    %73 = arith.addf %69, %72 : vector<2x8x1xf32>
    %74 = math.rsqrt %73 : vector<2x8x1xf32>
    %75 = vector.broadcast %74 : vector<2x8x1xf32> to vector<2x8x32xf32>
    %76 = arith.mulf %71, %75 : vector<2x8x32xf32>
    %77 = vector.shape_cast %9 : vector<1x32xf32> to vector<1x1x32xf32>
    %78 = vector.broadcast %77 : vector<1x1x32xf32> to vector<2x8x32xf32>
    %79 = arith.mulf %78, %76 : vector<2x8x32xf32>
    %80 = vector.shape_cast %11 : vector<1x32xf32> to vector<1x1x32xf32>
    %81 = vector.broadcast %80 : vector<1x1x32xf32> to vector<2x8x32xf32>
    %82 = arith.addf %79, %81 : vector<2x8x32xf32>
    %83 = vector.shape_cast %82 : vector<2x8x32xf32> to vector<16x32xf32>
    %c0_34 = arith.constant 0 : index
    %c0_35 = arith.constant 0 : index
    %c0_36 = arith.constant 0 : index
    %84 = vector.load %arg7[%c0_34, %c0_35, %c0_36] : memref<1x32x16xf32, #tpu.memory_space<vmem>>, vector<1x32x16xf32>
    %85 = vector.shape_cast %84 : vector<1x32x16xf32> to vector<32x16xf32>
    %cst_37 = arith.constant dense<0.000000e+00> : vector<16x16xf32>
    %86 = tpu.matmul %83, %85, %cst_37 {dimension_numbers = #tpu.dot_dimension_numbers<[1], [0], [0], [1], [0, 0, 1, 1], [], []>} : vector<16x32xf32>, vector<32x16xf32>, vector<16x16xf32> -> vector<16x16xf32>
    %cst_38 = arith.constant 5.000000e-01 : f32
    %87 = vector.broadcast %cst_38 : f32 to vector<16x16xf32>
    %88 = arith.mulf %87, %86 : vector<16x16xf32>
    %cst_39 = arith.constant 0.707106769 : f32
    %89 = vector.broadcast %cst_39 : f32 to vector<16x16xf32>
    %90 = arith.mulf %86, %89 : vector<16x16xf32>
    %91 = math.erf %90 : vector<16x16xf32>
    %cst_40 = arith.constant 1.000000e+00 : f32
    %92 = vector.broadcast %cst_40 : f32 to vector<16x16xf32>
    %93 = arith.addf %92, %91 : vector<16x16xf32>
    %94 = arith.mulf %88, %93 : vector<16x16xf32>
    %c0_41 = arith.constant 0 : index
    %c0_42 = arith.constant 0 : index
    %c0_43 = arith.constant 0 : index
    %95 = vector.load %arg8[%c0_41, %c0_42, %c0_43] : memref<1x16x32xf32, #tpu.memory_space<vmem>>, vector<1x16x32xf32>
    %96 = vector.shape_cast %95 : vector<1x16x32xf32> to vector<16x32xf32>
    %cst_44 = arith.constant dense<0.000000e+00> : vector<16x32xf32>
    %97 = tpu.matmul %94, %96, %cst_44 {dimension_numbers = #tpu.dot_dimension_numbers<[1], [0], [0], [1], [0, 0, 1, 1], [], []>} : vector<16x16xf32>, vector<16x32xf32>, vector<16x32xf32> -> vector<16x32xf32>
    %98 = vector.shape_cast %97 : vector<16x32xf32> to vector<2x8x32xf32>
    %99 = arith.addf %56, %98 : vector<2x8x32xf32>
    %c0_45 = arith.constant 0 : index
    %c0_46 = arith.constant 0 : index
    %c0_47 = arith.constant 0 : index
    %100 = vector.load %arg10[%c0_45, %c0_46, %c0_47] : memref<2x8x32xf32, #tpu.memory_space<vmem>>, vector<2x8x32xf32>
    tpu.vector_store %arg10[%c0_45, %c0_46, %c0_47], %99 {strides = array<i32>} : memref<2x8x32xf32, #tpu.memory_space<vmem>>, vector<2x8x32xf32>,
    %c0_48 = arith.constant 0 : index
    %c0_49 = arith.constant 0 : index
    %c0_50 = arith.constant 0 : index
    %101 = vector.load %arg9[%c0_48, %c0_49, %c0_50] : memref<2x8x32xf32, #tpu.memory_space<vmem>>, vector<2x8x32xf32>
    tpu.vector_store %arg9[%c0_48, %c0_49, %c0_50], %99 {strides = array<i32>} : memref<2x8x32xf32, #tpu.memory_space<vmem>>, vector<2x8x32xf32>,
    return
  }
  func.func @transform_0(%arg0: i32, %arg1: i32, %arg2: memref<2xi32, #tpu.memory_space<smem>>) -> (i32, i32, i32) {
    %c0_i32 = arith.constant 0 : i32
    %c0_i32_0 = arith.constant 0 : i32
    %c0_i32_1 = arith.constant 0 : i32
    return %arg0, %c0_i32, %c0_i32_0 : i32, i32, i32
  }
  func.func @transform_1(%arg0: i32, %arg1: i32, %arg2: memref<2xi32, #tpu.memory_space<smem>>) -> (i32, i32, i32) {
    %c3_i32 = arith.constant 3 : i32
    %0 = arith.muli %arg1, %c3_i32 : i32
    %1 = arith.index_cast %arg0 : i32 to index
    %2 = memref.load %arg2[%1] : memref<2xi32, #tpu.memory_space<smem>>
    %3 = arith.addi %0, %2 : i32
    %c0_i32 = arith.constant 0 : i32
    %c0_i32_0 = arith.constant 0 : i32
    %c0_i32_1 = arith.constant 0 : i32
    return %3, %c0_i32, %c0_i32_0 : i32, i32, i32
  }
  func.func @transform_2(%arg0: i32, %arg1: i32, %arg2: memref<2xi32, #tpu.memory_space<smem>>) -> (i32, i32, i32) {
    %c3_i32 = arith.constant 3 : i32
    %0 = arith.muli %arg1, %c3_i32 : i32
    %1 = arith.index_cast %arg0 : i32 to index
    %2 = memref.load %arg2[%1] : memref<2xi32, #tpu.memory_space<smem>>
    %3 = arith.addi %0, %2 : i32
    %c0_i32 = arith.constant 0 : i32
    %c0_i32_0 = arith.constant 0 : i32
    %c0_i32_1 = arith.constant 0 : i32
    return %3, %c0_i32, %c0_i32_0 : i32, i32, i32
  }
  func.func @transform_3(%arg0: i32, %arg1: i32, %arg2: memref<2xi32, #tpu.memory_space<smem>>) -> (i32, i32, i32) {
    %c3_i32 = arith.constant 3 : i32
    %0 = arith.muli %arg1, %c3_i32 : i32
    %1 = arith.index_cast %arg0 : i32 to index
    %2 = memref.load %arg2[%1] : memref<2xi32, #tpu.memory_space<smem>>
    %3 = arith.addi %0, %2 : i32
    %c0_i32 = arith.constant 0 : i32
    %c0_i32_0 = arith.constant 0 : i32
    %c0_i32_1 = arith.constant 0 : i32
    return %3, %c0_i32, %c0_i32_0 : i32, i32, i32
  }
  func.func @transform_4(%arg0: i32, %arg1: i32, %arg2: memref<2xi32, #tpu.memory_space<smem>>) -> (i32, i32, i32) {
    %c3_i32 = arith.constant 3 : i32
    %0 = arith.muli %arg1, %c3_i32 : i32
    %1 = arith.index_cast %arg0 : i32 to index
    %2 = memref.load %arg2[%1] : memref<2xi32, #tpu.memory_space<smem>>
    %3 = arith.addi %0, %2 : i32
    %c0_i32 = arith.constant 0 : i32
    %c0_i32_0 = arith.constant 0 : i32
    %c0_i32_1 = arith.constant 0 : i32
    return %3, %c0_i32, %c0_i32_0 : i32, i32, i32
  }
  func.func @transform_5(%arg0: i32, %arg1: i32, %arg2: memref<2xi32, #tpu.memory_space<smem>>) -> (i32, i32, i32) {
    %c3_i32 = arith.constant 3 : i32
    %0 = arith.muli %arg1, %c3_i32 : i32
    %1 = arith.index_cast %arg0 : i32 to index
    %2 = memref.load %arg2[%1] : memref<2xi32, #tpu.memory_space<smem>>
    %3 = arith.addi %0, %2 : i32
    %c0_i32 = arith.constant 0 : i32
    %c0_i32_0 = arith.constant 0 : i32
    %c0_i32_1 = arith.constant 0 : i32
    return %3, %c0_i32, %c0_i32_0 : i32, i32, i32
  }
  func.func @transform_6(%arg0: i32, %arg1: i32, %arg2: memref<2xi32, #tpu.memory_space<smem>>) -> (i32, i32, i32) {
    %c0_i32 = arith.constant 0 : i32
    %c0_i32_0 = arith.constant 0 : i32
    %c0_i32_1 = arith.constant 0 : i32
    return %arg0, %c0_i32, %c0_i32_0 : i32, i32, i32
  }
}

</mosaic_0001>

<llo_original>
// kernel: tpu_custom_call.1
$region0: #{tpu_custom_call.1}
  #allocation0 [shape = 'u32[]', space=smem, size = 0x4, offset = 0x4, fixed_abs, tag = 'smem constant byte address 0x4 - core index']
  #allocation1 [shape = 'u32[144,128]{1,0:T(1,128)}', space=vmem, size = 0x12000, scoped, tag = 'internal scratch']
  #allocation2 [shape = 'f32[2,8,32]{2,1,0:T(8,128)}', space=vmem, size = 0x2000, scoped, tag = 'scratch operand']
  #allocation3 [shape = 's32[1]{0}', space=sflag, size = 0x4, scoped, tag = 'scoped memory for tpu_custom_call.1']
  #allocation4 [shape = 'u8[512]{0}', space=smem, size = 0x200, scoped, tag = 'prefetched SMEM operand 0']
  %s0 = inlined_call_operand.vmem [shape: s32[2], index: 0, kind: input, shape index: {}]
  %s1 = inlined_call_operand.vmem [shape: f32[4,8,32], index: 1, kind: input, shape index: {}]
  %s2 = inlined_call_operand.vmem [shape: f32[6,4,32], index: 2, kind: input, shape index: {}]
  %s3 = inlined_call_operand.vmem [shape: f32[6,8,8], index: 3, kind: input, shape index: {}]
  %s4 = inlined_call_operand.vmem [shape: f32[6,8,8], index: 4, kind: input, shape index: {}]
  %s5 = inlined_call_operand.vmem [shape: f32[6,32,16], index: 5, kind: input, shape index: {}]
  %s6 = inlined_call_operand.vmem [shape: f32[6,16,32], index: 6, kind: input, shape index: {}]
  %s7 = inlined_call_operand.hbm [shape: f32[4,8,32], index: 7, kind: output, shape index: {}]
  %s8 = sld [smem:[#allocation0]]
  $region61: #{tpu_custom_call.1} parent=0
    _
  %s10 = ssub.s32 1, %s8
  %s11 = scalar_select 0, %s10, %s8
  %s12 = sshll.u32 %s0, 4
  %s13 = int_to_ptr.vmem [resolvable:$true] %s12
  %15 = dma.vmem_to_smem %s13, 16, [#allocation4], [#allocation3]
  %16 = dma.done [#allocation3], 16
  %17 = sfence
  $region1: #{tpu_custom_call.1} parent=0
    #allocation5 [shape = 'u8[16384]{0}', space=vmem, size = 0x4000, scoped, tag = 'output window, operand 0']
    #allocation6 [shape = 's32[2]{0}', space=sflag, size = 0x8, scoped, tag = 'scoped memory for tpu_custom_call.1']
    %18 = vsyncpa [#allocation6], 0
    %s19 = scalar_lea.sflag [#allocation6], 1
    %20 = vsyncpa %s19, 0
    loop: start=0, step=1, limit=6
    $region2: #{tpu_custom_call.1} parent=1 // loop_pre_header
      _
    $region3: #{tpu_custom_call.1} parent=1 // loop_header
      %s22 = sphi 0, %s26
      %p23 = scmp.ge.s32.totalorder %s22, 6
      %s29 = sphi 0, %s41
      %s30 = sphi 0, %s37
      %s31 = sphi 0, %s29
      %s32 = sphi 0, %s30
      %s33 = sphi 0, %s31
      %s34 = sphi 0, %s32
      %s44 = sphi 0, %s46
      %s47 = sphi 0, %s44
      %s48 = sphi 0, %s47
      %s64 = sphi 0, %s48
      %s76 = sphi 0, %s78
      %s79 = sphi 0, %s76
      %s80 = sphi 0, %s79
      %s96 = sphi 0, %s80
      %s108 = sphi 0, %s110
      %s111 = sphi 0, %s108
      %s112 = sphi 0, %s111
      %s128 = sphi 0, %s112
      %s140 = sphi 0, %s142
      %s143 = sphi 0, %s140
      %s144 = sphi 0, %s143
      %s160 = sphi 0, %s144
      %s172 = sphi 0, %s174
      %s175 = sphi 0, %s172
      %s176 = sphi 0, %s175
      %s192 = sphi 0, %s176
      %s204 = sphi 0, %s206
      %s207 = sphi 0, %s204
      %s208 = sphi 0, %s207
      %s224 = sphi 0, %s208
      %s230 = sphi 0, %s232
      %s233 = sphi 0, %s230
      %s234 = sphi 0, %s233
      %s250 = sphi 0, %s234
    $region4: #{tpu_custom_call.1} parent=1 // loop_header_branch
      %25 = sbr.rel (%p23) target = $region8
    $region5: #{tpu_custom_call.1} parent=1 // loop_body
      %s27 = ssub.s32 %s22, 1
      %s28 = ssub.s32 %s22, 2
      %s35 = sadd.s32 1, %s30
      %p36 = scmp.ge.s32.totalorder %s35, 2
      %s37 = scalar_select %p36, 0, %s35
      %s38 = sadd.s32 1, %s29
      %s39 = scalar_select %p36, %s38, %s29
      %p40 = scmp.ge.s32.totalorder %s39, 2
      %s41 = scalar_select %p40, 0, %s39
      %s42 = ssub.s32 %s29, %s41
      %p43 = scmp.eq.s32.totalorder %s42, 0
      %s45 = sadd.s32 %s44, 1
      %s46 = scalar_select %p43, %s44, %s45
      %p49 = pneg %p43
      %p50 = scmp.eq.s32.totalorder %s22, 3
      %p51 = por %p49, %p50
      %p52 = scmp.ne.s32.totalorder %s44, %s47
      %p53 = scmp.eq.s32.totalorder %s22, 0
      %p54 = por %p52, %p53
      %p55 = scmp.ne.s32.totalorder %s44, %s47
      %p56 = scmp.eq.s32.totalorder %s27, 3
      %p57 = por %p55, %p56
      %p58 = scmp.ne.s32.totalorder %s47, %s48
      %p59 = scmp.eq.s32.totalorder %s27, 0
      %p60 = por %p58, %p59
      %p61 = scmp.ne.s32.totalorder %s47, %s48
      %p62 = scmp.eq.s32.totalorder %s28, 3
      %p63 = por %p61, %p62
      %p65 = scmp.ne.s32.totalorder %s48, %s64
      %p66 = scmp.eq.s32.totalorder %s28, 0
      %p67 = por %p65, %p66
      %s68 = smul.u32 %s30, 3
      %s69 = sld [smem:[#allocation4 + %s29]]
      %s70 = sadd.s32 %s68, %s69
      %s71 = smul.u32 %s37, 3
      %s72 = sld [smem:[#allocation4 + %s41]]
      %s73 = sadd.s32 %s71, %s72
      %s74 = ssub.s32 %s70, %s73
      %p75 = scmp.eq.s32.totalorder %s74, 0
      %s77 = sadd.s32 %s76, 1
      %s78 = scalar_select %p75, %s76, %s77
      %p81 = pneg %p75
      %p82 = scmp.eq.s32.totalorder %s22, 3
      %p83 = por %p81, %p82
      %p84 = scmp.ne.s32.totalorder %s76, %s79
      %p85 = scmp.eq.s32.totalorder %s22, 0
      %p86 = por %p84, %p85
      %p87 = scmp.ne.s32.totalorder %s76, %s79
      %p88 = scmp.eq.s32.totalorder %s27, 3
      %p89 = por %p87, %p88
      %p90 = scmp.ne.s32.totalorder %s79, %s80
      %p91 = scmp.eq.s32.totalorder %s27, 0
      %p92 = por %p90, %p91
      %p93 = scmp.ne.s32.totalorder %s79, %s80
      %p94 = scmp.eq.s32.totalorder %s28, 3
      %p95 = por %p93, %p94
      %p97 = scmp.ne.s32.totalorder %s80, %s96
      %p98 = scmp.eq.s32.totalorder %s28, 0
      %p99 = por %p97, %p98
      %s100 = smul.u32 %s30, 3
      %s101 = sld [smem:[#allocation4 + %s29]]
      %s102 = sadd.s32 %s100, %s101
      %s103 = smul.u32 %s37, 3
      %s104 = sld [smem:[#allocation4 + %s41]]
      %s105 = sadd.s32 %s103, %s104
      %s106 = ssub.s32 %s102, %s105
      %p107 = scmp.eq.s32.totalorder %s106, 0
      %s109 = sadd.s32 %s108, 1
      %s110 = scalar_select %p107, %s108, %s109
      %p113 = pneg %p107
      %p114 = scmp.eq.s32.totalorder %s22, 3
      %p115 = por %p113, %p114
      %p116 = scmp.ne.s32.totalorder %s108, %s111
      %p117 = scmp.eq.s32.totalorder %s22, 0
      %p118 = por %p116, %p117
      %p119 = scmp.ne.s32.totalorder %s108, %s111
      %p120 = scmp.eq.s32.totalorder %s27, 3
      %p121 = por %p119, %p120
      %p122 = scmp.ne.s32.totalorder %s111, %s112
      %p123 = scmp.eq.s32.totalorder %s27, 0
      %p124 = por %p122, %p123
      %p125 = scmp.ne.s32.totalorder %s111, %s112
      %p126 = scmp.eq.s32.totalorder %s28, 3
      %p127 = por %p125, %p126
      %p129 = scmp.ne.s32.totalorder %s112, %s128
      %p130 = scmp.eq.s32.totalorder %s28, 0
      %p131 = por %p129, %p130
      %s132 = smul.u32 %s30, 3
      %s133 = sld [smem:[#allocation4 + %s29]]
      %s134 = sadd.s32 %s132, %s133
      %s135 = smul.u32 %s37, 3
      %s136 = sld [smem:[#allocation4 + %s41]]
      %s137 = sadd.s32 %s135, %s136
      %s138 = ssub.s32 %s134, %s137
      %p139 = scmp.eq.s32.totalorder %s138, 0
      %s141 = sadd.s32 %s140, 1
      %s142 = scalar_select %p139, %s140, %s141
      %p145 = pneg %p139
      %p146 = scmp.eq.s32.totalorder %s22, 3
      %p147 = por %p145, %p146
      %p148 = scmp.ne.s32.totalorder %s140, %s143
      %p149 = scmp.eq.s32.totalorder %s22, 0
      %p150 = por %p148, %p149
      %p151 = scmp.ne.s32.totalorder %s140, %s143
      %p152 = scmp.eq.s32.totalorder %s27, 3
      %p153 = por %p151, %p152
      %p154 = scmp.ne.s32.totalorder %s143, %s144
      %p155 = scmp.eq.s32.totalorder %s27, 0
      %p156 = por %p154, %p155
      %p157 = scmp.ne.s32.totalorder %s143, %s144
      %p158 = scmp.eq.s32.totalorder %s28, 3
      %p159 = por %p157, %p158
      %p161 = scmp.ne.s32.totalorder %s144, %s160
      %p162 = scmp.eq.s32.totalorder %s28, 0
      %p163 = por %p161, %p162
      %s164 = smul.u32 %s30, 3
      %s165 = sld [smem:[#allocation4 + %s29]]
      %s166 = sadd.s32 %s164, %s165
      %s167 = smul.u32 %s37, 3
      %s168 = sld [smem:[#allocation4 + %s41]]
      %s169 = sadd.s32 %s167, %s168
      %s170 = ssub.s32 %s166, %s169
      %p171 = scmp.eq.s32.totalorder %s170, 0
      %s173 = sadd.s32 %s172, 1
      %s174 = scalar_select %p171, %s172, %s173
      %p177 = pneg %p171
      %p178 = scmp.eq.s32.totalorder %s22, 3
      %p179 = por %p177, %p178
      %p180 = scmp.ne.s32.totalorder %s172, %s175
      %p181 = scmp.eq.s32.totalorder %s22, 0
      %p182 = por %p180, %p181
      %p183 = scmp.ne.s32.totalorder %s172, %s175
      %p184 = scmp.eq.s32.totalorder %s27, 3
      %p185 = por %p183, %p184
      %p186 = scmp.ne.s32.totalorder %s175, %s176
      %p187 = scmp.eq.s32.totalorder %s27, 0
      %p188 = por %p186, %p187
      %p189 = scmp.ne.s32.totalorder %s175, %s176
      %p190 = scmp.eq.s32.totalorder %s28, 3
      %p191 = por %p189, %p190
      %p193 = scmp.ne.s32.totalorder %s176, %s192
      %p194 = scmp.eq.s32.totalorder %s28, 0
      %p195 = por %p193, %p194
      %s196 = smul.u32 %s30, 3
      %s197 = sld [smem:[#allocation4 + %s29]]
      %s198 = sadd.s32 %s196, %s197
      %s199 = smul.u32 %s37, 3
      %s200 = sld [smem:[#allocation4 + %s41]]
      %s201 = sadd.s32 %s199, %s200
      %s202 = ssub.s32 %s198, %s201
      %p203 = scmp.eq.s32.totalorder %s202, 0
      %s205 = sadd.s32 %s204, 1
      %s206 = scalar_select %p203, %s204, %s205
      %p209 = pneg %p203
      %p210 = scmp.eq.s32.totalorder %s22, 3
      %p211 = por %p209, %p210
      %p212 = scmp.ne.s32.totalorder %s204, %s207
      %p213 = scmp.eq.s32.totalorder %s22, 0
      %p214 = por %p212, %p213
      %p215 = scmp.ne.s32.totalorder %s204, %s207
      %p216 = scmp.eq.s32.totalorder %s27, 3
      %p217 = por %p215, %p216
      %p218 = scmp.ne.s32.totalorder %s207, %s208
      %p219 = scmp.eq.s32.totalorder %s27, 0
      %p220 = por %p218, %p219
      %p221 = scmp.ne.s32.totalorder %s207, %s208
      %p222 = scmp.eq.s32.totalorder %s28, 3
      %p223 = por %p221, %p222
      %p225 = scmp.ne.s32.totalorder %s208, %s224
      %p226 = scmp.eq.s32.totalorder %s28, 0
      %p227 = por %p225, %p226
      %s228 = ssub.s32 %s29, %s41
      %p229 = scmp.eq.s32.totalorder %s228, 0
      %s231 = sadd.s32 %s230, 1
      %s232 = scalar_select %p229, %s230, %s231
      %p235 = pneg %p229
      %p236 = scmp.eq.s32.totalorder %s22, 3
      %p237 = por %p235, %p236
      %p238 = scmp.ne.s32.totalorder %s230, %s233
      %p239 = scmp.eq.s32.totalorder %s22, 0
      %p240 = por %p238, %p239
      %p241 = scmp.ne.s32.totalorder %s230, %s233
      %p242 = scmp.eq.s32.totalorder %s27, 3
      %p243 = por %p241, %p242
      %p244 = scmp.ne.s32.totalorder %s233, %s234
      %p245 = scmp.eq.s32.totalorder %s27, 0
      %p246 = por %p244, %p245
      %p247 = scmp.ne.s32.totalorder %s233, %s234
      %p248 = scmp.eq.s32.totalorder %s28, 3
      %p249 = por %p247, %p248
      %p251 = scmp.ne.s32.totalorder %s234, %s250
      %p252 = scmp.eq.s32.totalorder %s28, 0
      %p253 = por %p251, %p252
      %p254 = scmp.le.s32.totalorder 1, %s22
      %p255 = scmp.lt.s32.totalorder %s22, 5
      %p256 = pnand %p254, %p255
      %p257 = pneg %p256
      // Predicated region
      $region9: #{tpu_custom_call.1} parent=5 // pred_check
        _
      $region10: #{tpu_custom_call.1} parent=5 // pred_check_branch
        %259 = sbr.rel (%p256) target = $region12
      $region11: #{tpu_custom_call.1} parent=5 // pred_region
        %s260 = ssub.s32 %s22, 1
      $region12: #{tpu_custom_call.1} parent=5 // pred_fallthru
        _
      %p261 = scmp.lt.s32.totalorder %s22, 4
      // Predicated region
      $region13: #{tpu_custom_call.1} parent=5 // pred_check
        %p262 = pneg %p261
      $region14: #{tpu_custom_call.1} parent=5 // pred_check_branch
        %264 = sbr.rel (%p262) target = $region16
      $region15: #{tpu_custom_call.1} parent=5 // pred_region
        // Predicated region
        $region17: #{tpu_custom_call.1} parent=15 // pred_check
          %p265 = pneg %p54
        $region18: #{tpu_custom_call.1} parent=15 // pred_check_branch
          %267 = sbr.rel (%p265) target = $region20
        $region19: #{tpu_custom_call.1} parent=15 // pred_region
          %s268 = smul.u32 2, %s29
          %p269 = scmp.lt.s32.totalorder %s268, 3
          %s270 = scalar_select %p269, %s268, 3
          %s271 = smul.addr %s270, 8
          %s272 = scalar_lea.vmem %s1, %s271
          %s273 = smul.u32 2, %s29
        $region20: #{tpu_custom_call.1} parent=15 // pred_fallthru
          _
        // Predicated region
        $region21: #{tpu_custom_call.1} parent=15 // pred_check
          %p274 = pneg %p86
        $region22: #{tpu_custom_call.1} parent=15 // pred_check_branch
          %276 = sbr.rel (%p274) target = $region24
        $region23: #{tpu_custom_call.1} parent=15 // pred_region
          %s277 = smul.u32 %s30, 3
          %s278 = sld [smem:[#allocation4 + %s29]]
          %s279 = sadd.s32 %s277, %s278
          %p280 = scmp.lt.s32.totalorder %s279, 5
          %s281 = scalar_select %p280, %s279, 5
          %s282 = smul.addr %s281, 4
          %s283 = scalar_lea.vmem %s2, %s282
          %s284 = smul.u32 %s30, 3
          %s285 = sld [smem:[#allocation4 + %s29]]
          %s286 = sadd.s32 %s284, %s285
        $region24: #{tpu_custom_call.1} parent=15 // pred_fallthru
          _
        // Predicated region
        $region25: #{tpu_custom_call.1} parent=15 // pred_check
          %p287 = pneg %p118
        $region26: #{tpu_custom_call.1} parent=15 // pred_check_branch
          %289 = sbr.rel (%p287) target = $region28
        $region27: #{tpu_custom_call.1} parent=15 // pred_region
          %s290 = smul.u32 %s30, 3
          %s291 = sld [smem:[#allocation4 + %s29]]
          %s292 = sadd.s32 %s290, %s291
          %p293 = scmp.lt.s32.totalorder %s292, 5
          %s294 = scalar_select %p293, %s292, 5
          %s295 = smul.addr %s294, 8
          %s296 = scalar_lea.vmem %s3, %s295
          %s297 = smul.u32 %s30, 3
          %s298 = sld [smem:[#allocation4 + %s29]]
          %s299 = sadd.s32 %s297, %s298
        $region28: #{tpu_custom_call.1} parent=15 // pred_fallthru
          _
        // Predicated region
        $region29: #{tpu_custom_call.1} parent=15 // pred_check
          %p300 = pneg %p150
        $region30: #{tpu_custom_call.1} parent=15 // pred_check_branch
          %302 = sbr.rel (%p300) target = $region32
        $region31: #{tpu_custom_call.1} parent=15 // pred_region
          %s303 = smul.u32 %s30, 3
          %s304 = sld [smem:[#allocation4 + %s29]]
          %s305 = sadd.s32 %s303, %s304
          %p306 = scmp.lt.s32.totalorder %s305, 5
          %s307 = scalar_select %p306, %s305, 5
          %s308 = smul.addr %s307, 8
          %s309 = scalar_lea.vmem %s4, %s308
          %s310 = smul.u32 %s30, 3
          %s311 = sld [smem:[#allocation4 + %s29]]
          %s312 = sadd.s32 %s310, %s311
        $region32: #{tpu_custom_call.1} parent=15 // pred_fallthru
          _
        // Predicated region
        $region33: #{tpu_custom_call.1} parent=15 // pred_check
          %p313 = pneg %p182
        $region34: #{tpu_custom_call.1} parent=15 // pred_check_branch
          %315 = sbr.rel (%p313) target = $region36
        $region35: #{tpu_custom_call.1} parent=15 // pred_region
          %s316 = smul.u32 %s30, 3
          %s317 = sld [smem:[#allocation4 + %s29]]
          %s318 = sadd.s32 %s316, %s317
          %p319 = scmp.lt.s32.totalorder %s318, 5
          %s320 = scalar_select %p319, %s318, 5
          %s321 = smul.addr %s320, 4
          %s322 = smul.addr %s321, 8
          %s323 = scalar_lea.vmem %s5, %s322
          %s324 = smul.u32 %s30, 3
          %s325 = sld [smem:[#allocation4 + %s29]]
          %s326 = sadd.s32 %s324, %s325
        $region36: #{tpu_custom_call.1} parent=15 // pred_fallthru
          _
        // Predicated region
        $region37: #{tpu_custom_call.1} parent=15 // pred_check
          %p327 = pneg %p214
        $region38: #{tpu_custom_call.1} parent=15 // pred_check_branch
          %329 = sbr.rel (%p327) target = $region40
        $region39: #{tpu_custom_call.1} parent=15 // pred_region
          %s330 = smul.u32 %s30, 3
          %s331 = sld [smem:[#allocation4 + %s29]]
          %s332 = sadd.s32 %s330, %s331
          %p333 = scmp.lt.s32.totalorder %s332, 5
          %s334 = scalar_select %p333, %s332, 5
          %s335 = smul.addr %s334, 2
          %s336 = smul.addr %s335, 8
          %s337 = scalar_lea.vmem %s6, %s336
          %s338 = smul.u32 %s30, 3
          %s339 = sld [smem:[#allocation4 + %s29]]
          %s340 = sadd.s32 %s338, %s339
        $region40: #{tpu_custom_call.1} parent=15 // pred_fallthru
          _
      $region16: #{tpu_custom_call.1} parent=5 // pred_fallthru
        _
      %p341 = scmp.le.s32.totalorder 1, %s22
      %p342 = scmp.lt.s32.totalorder %s22, 5
      %p343 = pnand %p341, %p342
      %p344 = pneg %p343
      // Predicated region
      $region41: #{tpu_custom_call.1} parent=5 // pred_check
        _
      $region42: #{tpu_custom_call.1} parent=5 // pred_check_branch
        %346 = sbr.rel (%p343) target = $region44
      $region43: #{tpu_custom_call.1} parent=5 // pred_region
        %s347 = ssub.s32 %s22, 1
        %s348 = smul.u32 2, %s31
        %p349 = scmp.lt.s32.totalorder %s348, 3
        %s350 = scalar_select %p349, %s348, 3
        %s351 = smul.addr %s350, 8
        %s352 = scalar_lea.vmem %s1, %s351
        %p353 = pneg %p60
        %p354 = pneg %p57
        %s355 = smul.u32 %s32, 3
        %s356 = sld [smem:[#allocation4 + %s31]]
        %s357 = sadd.s32 %s355, %s356
        %p358 = scmp.lt.s32.totalorder %s357, 5
        %s359 = scalar_select %p358, %s357, 5
        %s360 = smul.addr %s359, 4
        %s361 = scalar_lea.vmem %s2, %s360
        %p362 = pneg %p92
        %p363 = pneg %p89
        %s364 = smul.u32 %s32, 3
        %s365 = sld [smem:[#allocation4 + %s31]]
        %s366 = sadd.s32 %s364, %s365
        %p367 = scmp.lt.s32.totalorder %s366, 5
        %s368 = scalar_select %p367, %s366, 5
        %s369 = smul.addr %s368, 8
        %s370 = scalar_lea.vmem %s3, %s369
        %p371 = pneg %p124
        %p372 = pneg %p121
        %s373 = smul.u32 %s32, 3
        %s374 = sld [smem:[#allocation4 + %s31]]
        %s375 = sadd.s32 %s373, %s374
        %p376 = scmp.lt.s32.totalorder %s375, 5
        %s377 = scalar_select %p376, %s375, 5
        %s378 = smul.addr %s377, 8
        %s379 = scalar_lea.vmem %s4, %s378
        %p380 = pneg %p156
        %p381 = pneg %p153
        %s382 = smul.u32 %s32, 3
        %s383 = sld [smem:[#allocation4 + %s31]]
        %s384 = sadd.s32 %s382, %s383
        %p385 = scmp.lt.s32.totalorder %s384, 5
        %s386 = scalar_select %p385, %s384, 5
        %s387 = smul.addr %s386, 4
        %s388 = smul.addr %s387, 8
        %s389 = scalar_lea.vmem %s5, %s388
        %p390 = pneg %p188
        %p391 = pneg %p185
        %s392 = smul.u32 %s32, 3
        %s393 = sld [smem:[#allocation4 + %s31]]
        %s394 = sadd.s32 %s392, %s393
        %p395 = scmp.lt.s32.totalorder %s394, 5
        %s396 = scalar_select %p395, %s394, 5
        %s397 = smul.addr %s396, 2
        %s398 = smul.addr %s397, 8
        %s399 = scalar_lea.vmem %s6, %s398
        %p400 = pneg %p220
        %p401 = pneg %p217
        %p402 = pneg %p246
        %p403 = pneg %p243
        %s404 = sand.u32 %s233, 1
        %s405 = scalar_lea.sflag [#allocation6], %s404
        %s406 = sand.u32 %s233, 1
        %s407 = smul.addr %s406, 16
        %s408 = scalar_lea.vmem [#allocation5], %s407
        %s409 = smul.u32 2, %s31
        %p410 = scmp.lt.s32.totalorder %s409, 3
        %s411 = scalar_select %p410, %s409, 3
        %s412 = smul.addr %s411, 8
        %s413 = scalar_lea.vmem %s1, %s412
        %s414 = smul.u32 2, %s31
        %s415 = smul.u32 %s32, 3
        %s416 = sld [smem:[#allocation4 + %s31]]
        %s417 = sadd.s32 %s415, %s416
        %p418 = scmp.lt.s32.totalorder %s417, 5
        %s419 = scalar_select %p418, %s417, 5
        %s420 = smul.addr %s419, 4
        %s421 = scalar_lea.vmem %s2, %s420
        %s422 = smul.u32 %s32, 3
        %s423 = sld [smem:[#allocation4 + %s31]]
        %s424 = sadd.s32 %s422, %s423
        %s425 = smul.u32 %s32, 3
        %s426 = sld [smem:[#allocation4 + %s31]]
        %s427 = sadd.s32 %s425, %s426
        %p428 = scmp.lt.s32.totalorder %s427, 5
        %s429 = scalar_select %p428, %s427, 5
        %s430 = smul.addr %s429, 8
        %s431 = scalar_lea.vmem %s3, %s430
        %s432 = smul.u32 %s32, 3
        %s433 = sld [smem:[#allocation4 + %s31]]
        %s434 = sadd.s32 %s432, %s433
        %s435 = smul.u32 %s32, 3
        %s436 = sld [smem:[#allocation4 + %s31]]
        %s437 = sadd.s32 %s435, %s436
        %p438 = scmp.lt.s32.totalorder %s437, 5
        %s439 = scalar_select %p438, %s437, 5
        %s440 = smul.addr %s439, 8
        %s441 = scalar_lea.vmem %s4, %s440
        %s442 = smul.u32 %s32, 3
        %s443 = sld [smem:[#allocation4 + %s31]]
        %s444 = sadd.s32 %s442, %s443
        %s445 = smul.u32 %s32, 3
        %s446 = sld [smem:[#allocation4 + %s31]]
        %s447 = sadd.s32 %s445, %s446
        %p448 = scmp.lt.s32.totalorder %s447, 5
        %s449 = scalar_select %p448, %s447, 5
        %s450 = smul.addr %s449, 4
        %s451 = smul.addr %s450, 8
        %s452 = scalar_lea.vmem %s5, %s451
        %s453 = smul.u32 %s32, 3
        %s454 = sld [smem:[#allocation4 + %s31]]
        %s455 = sadd.s32 %s453, %s454
        %s456 = smul.u32 %s32, 3
        %s457 = sld [smem:[#allocation4 + %s31]]
        %s458 = sadd.s32 %s456, %s457
        %p459 = scmp.lt.s32.totalorder %s458, 5
        %s460 = scalar_select %p459, %s458, 5
        %s461 = smul.addr %s460, 2
        %s462 = smul.addr %s461, 8
        %s463 = scalar_lea.vmem %s6, %s462
        %s464 = smul.u32 %s32, 3
        %s465 = sld [smem:[#allocation4 + %s31]]
        %s466 = sadd.s32 %s464, %s465
        %s467 = smul.u32 2, %s31
        %p468 = scmp.eq.s32.totalorder %s32, 0
        // Predicated region
        $region45: #{tpu_custom_call.1} parent=43 // pred_check
          %p469 = pneg %p468
        $region46: #{tpu_custom_call.1} parent=43 // pred_check_branch
          %471 = sbr.rel (%p469) target = $region48
        $region47: #{tpu_custom_call.1} parent=43 // pred_region
          %v472 = vld [vmem:[%s413] sm:$0xff]
          %v473 = vld [vmem:[%s413 + $0x8] sm:$0xff]
          %vm474 = vcmask 261120
          %475 = vst.msk [vmem:[#allocation2] sm:$0xff] %vm474, %v472
          %476 = vst.msk [vmem:[#allocation2 + $0x8] sm:$0xff] %vm474, %v473
        $region48: #{tpu_custom_call.1} parent=43 // pred_fallthru
          _
        %v477 = vld [vmem:[#allocation2] sm:$0xff]
        %v478 = vld [vmem:[#allocation2 + $0x8] sm:$0xff]
        %v479 = vld [vmem:[%s421] sm:$0x1]
        %v480 = vld [vmem:[%s421 + $0x1] sm:$0x1]
        %v481 = vld [vmem:[%s421 + $0x2] sm:$0x1]
        %v482 = vld [vmem:[%s421 + $0x3] sm:$0x1]
        %vm483 = vcmask 261120
        %v484 = vsel %vm483, %v477, 0.0
        %485 = vadd.xlane.f32.xlu0 %v484
        %v486 = vpop.xlane.xlu0 %485
        %v487 = vsel %vm483, %v478, 0.0
        %488 = vadd.xlane.f32.xlu0 %v487
        %v489 = vpop.xlane.xlu0 %488
        %v490 = vrcp.pop 32.0
        %v491 = vmul.f32 %v486, %v490
        %v492 = vmul.f32 %v489, %v490
        %v493 = vmul.f32 %v477, %v477
        %v494 = vmul.f32 %v478, %v478
        %v495 = vsel %vm483, %v493, 0.0
        %496 = vadd.xlane.f32.xlu0 %v495
        %v497 = vpop.xlane.xlu0 %496
        %v498 = vsel %vm483, %v494, 0.0
        %499 = vadd.xlane.f32.xlu0 %v498
        %v500 = vpop.xlane.xlu0 %499
        %v501 = vmul.f32 %v497, %v490
        %v502 = vmul.f32 %v500, %v490
        %v503 = vmul.f32 %v491, %v491
        %v504 = vmul.f32 %v492, %v492
        %v505 = vsub.f32 %v501, %v503
        %v506 = vsub.f32 %v502, %v504
        %v507 = vmax.f32 %v505, 0.0
        %v508 = vmax.f32 %v506, 0.0
        %v509 = vsub.f32 %v477, %v491
        %v510 = vsub.f32 %v478, %v492
        %v511 = vadd.f32 %v507, 1e-05
        %v512 = vadd.f32 %v508, 1e-05
        %v513 = vrsqrt.pop %v511
        %v514 = vrsqrt.pop %v512
        %v515 = vmul.f32 %v509, %v513
        %v516 = vmul.f32 %v510, %v514
        %v517 = vlaneseq
        %v518 = vshrl.u32 %v517, 7
        %v519 = vsub.s32 0, %v518
        %v520 = vrot.slane %v479, %v519
        %v521 = vmul.f32 %v520, %v515
        %v522 = vmul.f32 %v520, %v516
        %v523 = vlaneseq
        %v524 = vshrl.u32 %v523, 7
        %v525 = vsub.s32 0, %v524
        %v526 = vrot.slane %v480, %v525
        %v527 = vadd.f32 %v521, %v526
        %v528 = vadd.f32 %v522, %v526
        %v529 = vld [vmem:[%s431] sm:$0xff]
        %vm530 = vcmask 64512
        %v532 = vsel %vm530, %v529, 0
        %534 = vmatprep.subr.mxu0 0.0
        %535 = vmatpush1.msra.mxu0 %v527
        %536 = vmatprep.subr.mxu0 0.0
        %537 = vmatpush1.msra.mxu0 0.0
        %538 = vmatprep.subr.mxu0 0.0
        %539 = vmatpush1.msra.mxu0 0.0
        %540 = vmatprep.subr.mxu0 0.0
        %541 = vmatpush1.msra.mxu0 0.0
        %542 = vmatprep.subr.mxu0 0.0
        %543 = vmatpush1.msra.mxu0 0.0
        %544 = vmatprep.subr.mxu0 0.0
        %545 = vmatpush1.msra.mxu0 0.0
        %546 = vmatprep.subr.mxu0 0.0
        %547 = vmatpush1.msra.mxu0 0.0
        %548 = vmatprep.subr.mxu0 0.0
        %549 = vmatpush1.msra.mxu0 0.0
        %550 = vmatprep.subr.mxu0 0.0
        %551 = vmatpush1.msra.mxu0 0.0
        %552 = vmatprep.subr.mxu0 0.0
        %553 = vmatpush1.msra.mxu0 0.0
        %554 = vmatprep.subr.mxu0 0.0
        %555 = vmatpush1.msra.mxu0 0.0
        %556 = vmatprep.subr.mxu0 0.0
        %557 = vmatpush1.msra.mxu0 0.0
        %558 = vmatprep.subr.mxu0 0.0
        %559 = vmatpush1.msra.mxu0 0.0
        %560 = vmatprep.subr.mxu0 0.0
        %561 = vmatpush1.msra.mxu0 0.0
        %562 = vmatprep.subr.mxu0 0.0
        %563 = vmatpush1.msra.mxu0 0.0
        %564 = vmatprep.subr.mxu0 0.0
        %565 = vmatpush1.msra.mxu0 0.0
        %566 = vmatprep.subr.mxu0 0.0
        %567 = vmatpush1.msra.mxu0 0.0
        %568 = vmatprep.subr.mxu0 0.0
        %569 = vmatpush1.msra.mxu0 0.0
        %570 = vmatprep.subr.mxu0 0.0
        %571 = vmatpush1.msra.mxu0 0.0
        %572 = vmatprep.subr.mxu0 0.0
        %573 = vmatpush1.msra.mxu0 0.0
        %574 = vmatprep.subr.mxu0 0.0
        %575 = vmatpush1.msra.mxu0 0.0
        %576 = vmatprep.subr.mxu0 0.0
        %577 = vmatpush1.msra.mxu0 0.0
        %578 = vmatprep.subr.mxu0 0.0
        %579 = vmatpush1.msra.mxu0 0.0
        %580 = vmatprep.subr.mxu0 0.0
        %581 = vmatpush1.msra.mxu0 0.0
        %582 = vmatprep.subr.mxu0 0.0
        %583 = vmatpush1.msra.mxu0 0.0
        %584 = vmatprep.subr.mxu0 0.0
        %585 = vmatpush1.msra.mxu0 0.0
        %586 = vmatprep.subr.mxu0 0.0
        %587 = vmatpush1.msra.mxu0 0.0
        %588 = vmatprep.subr.mxu0 0.0
        %589 = vmatpush1.msra.mxu0 0.0
        %590 = vmatprep.subr.mxu0 0.0
        %591 = vmatpush1.msra.mxu0 0.0
        %592 = vmatprep.subr.mxu0 0.0
        %593 = vmatpush1.msra.mxu0 0.0
        %594 = vmatprep.subr.mxu0 0.0
        %595 = vmatpush1.msra.mxu0 0.0
        %596 = vmatprep.subr.mxu0 0.0
        %597 = vmatpush1.msra.mxu0 0.0
        %598 = vmatprep.mubr.f32.mxu0 0.0
        %599 = vmatmul.mubr.f32.gmra.mrb[0].mxu0 %v532
        %v600 = vpop.f32.mrb[0].mxu0
        %v601 = vadd.f32 0.0, %v600
        %v602 = vpop.f32.mrb[0].mxu0
        %603 = vdwg.mxu0
        %604 = vmatprep.subr.mxu0 0.0
        %605 = vmatpush1.msra.mxu0 %v528
        %606 = vmatprep.subr.mxu0 0.0
        %607 = vmatpush1.msra.mxu0 0.0
        %608 = vmatprep.subr.mxu0 0.0
        %609 = vmatpush1.msra.mxu0 0.0
        %610 = vmatprep.subr.mxu0 0.0
        %611 = vmatpush1.msra.mxu0 0.0
        %612 = vmatprep.subr.mxu0 0.0
        %613 = vmatpush1.msra.mxu0 0.0
        %614 = vmatprep.subr.mxu0 0.0
        %615 = vmatpush1.msra.mxu0 0.0
        %616 = vmatprep.subr.mxu0 0.0
        %617 = vmatpush1.msra.mxu0 0.0
        %618 = vmatprep.subr.mxu0 0.0
        %619 = vmatpush1.msra.mxu0 0.0
        %620 = vmatprep.subr.mxu0 0.0
        %621 = vmatpush1.msra.mxu0 0.0
        %622 = vmatprep.subr.mxu0 0.0
        %623 = vmatpush1.msra.mxu0 0.0
        %624 = vmatprep.subr.mxu0 0.0
        %625 = vmatpush1.msra.mxu0 0.0
        %626 = vmatprep.subr.mxu0 0.0
        %627 = vmatpush1.msra.mxu0 0.0
        %628 = vmatprep.subr.mxu0 0.0
        %629 = vmatpush1.msra.mxu0 0.0
        %630 = vmatprep.subr.mxu0 0.0
        %631 = vmatpush1.msra.mxu0 0.0
        %632 = vmatprep.subr.mxu0 0.0
        %633 = vmatpush1.msra.mxu0 0.0
        %634 = vmatprep.subr.mxu0 0.0
        %635 = vmatpush1.msra.mxu0 0.0
        %636 = vmatprep.subr.mxu0 0.0
        %637 = vmatpush1.msra.mxu0 0.0
        %638 = vmatprep.subr.mxu0 0.0
        %639 = vmatpush1.msra.mxu0 0.0
        %640 = vmatprep.subr.mxu0 0.0
        %641 = vmatpush1.msra.mxu0 0.0
        %642 = vmatprep.subr.mxu0 0.0
        %643 = vmatpush1.msra.mxu0 0.0
        %644 = vmatprep.subr.mxu0 0.0
        %645 = vmatpush1.msra.mxu0 0.0
        %646 = vmatprep.subr.mxu0 0.0
        %647 = vmatpush1.msra.mxu0 0.0
        %648 = vmatprep.subr.mxu0 0.0
        %649 = vmatpush1.msra.mxu0 0.0
        %650 = vmatprep.subr.mxu0 0.0
        %651 = vmatpush1.msra.mxu0 0.0
        %652 = vmatprep.subr.mxu0 0.0
        %653 = vmatpush1.msra.mxu0 0.0
        %654 = vmatprep.subr.mxu0 0.0
        %655 = vmatpush1.msra.mxu0 0.0
        %656 = vmatprep.subr.mxu0 0.0
        %657 = vmatpush1.msra.mxu0 0.0
        %658 = vmatprep.subr.mxu0 0.0
        %659 = vmatpush1.msra.mxu0 0.0
        %660 = vmatprep.subr.mxu0 0.0
        %661 = vmatpush1.msra.mxu0 0.0
        %662 = vmatprep.subr.mxu0 0.0
        %663 = vmatpush1.msra.mxu0 0.0
        %664 = vmatprep.subr.mxu0 0.0
        %665 = vmatpush1.msra.mxu0 0.0
        %666 = vmatprep.subr.mxu0 0.0
        %667 = vmatpush1.msra.mxu0 0.0
        %668 = vmatprep.mubr.f32.mxu0 0.0
        %669 = vmatmul.mubr.f32.gmra.mrb[0].mxu0 %v532
        %v670 = vpop.f32.mrb[0].mxu0
        %v671 = vadd.f32 0.0, %v670
        %v672 = vpop.f32.mrb[0].mxu0
        %673 = vdwg.mxu0
        %v674 = vmul.f32 %v601, 0.5
        %v675 = vmul.f32 %v671, 0.5
        %v676 = vmul.f32 %v601, 0.70710677
        %v677 = vmul.f32 %v671, 0.70710677
        %v678 = verf.f32.pop %v676
        %v679 = verf.f32.pop %v677
        %v680 = vadd.f32 %v678, 1.0
        %v681 = vadd.f32 %v679, 1.0
        %v682 = vmul.f32 %v674, %v680
        %v683 = vmul.f32 %v675, %v681
        %v684 = vld [vmem:[%s441] sm:$0xff]
        %v686 = vsel %vm530, %v684, 0
        %688 = vmatprep.subr.mxu0 0.0
        %689 = vmatpush1.msra.mxu0 %v682
        %690 = vmatprep.subr.mxu0 0.0
        %691 = vmatpush1.msra.mxu0 0.0
        %692 = vmatprep.subr.mxu0 0.0
        %693 = vmatpush1.msra.mxu0 0.0
        %694 = vmatprep.subr.mxu0 0.0
        %695 = vmatpush1.msra.mxu0 0.0
        %696 = vmatprep.subr.mxu0 0.0
        %697 = vmatpush1.msra.mxu0 0.0
        %698 = vmatprep.subr.mxu0 0.0
        %699 = vmatpush1.msra.mxu0 0.0
        %700 = vmatprep.subr.mxu0 0.0
        %701 = vmatpush1.msra.mxu0 0.0
        %702 = vmatprep.subr.mxu0 0.0
        %703 = vmatpush1.msra.mxu0 0.0
        %704 = vmatprep.subr.mxu0 0.0
        %705 = vmatpush1.msra.mxu0 0.0
        %706 = vmatprep.subr.mxu0 0.0
        %707 = vmatpush1.msra.mxu0 0.0
        %708 = vmatprep.subr.mxu0 0.0
        %709 = vmatpush1.msra.mxu0 0.0
        %710 = vmatprep.subr.mxu0 0.0
        %711 = vmatpush1.msra.mxu0 0.0
        %712 = vmatprep.subr.mxu0 0.0
        %713 = vmatpush1.msra.mxu0 0.0
        %714 = vmatprep.subr.mxu0 0.0
        %715 = vmatpush1.msra.mxu0 0.0
        %716 = vmatprep.subr.mxu0 0.0
        %717 = vmatpush1.msra.mxu0 0.0
        %718 = vmatprep.subr.mxu0 0.0
        %719 = vmatpush1.msra.mxu0 0.0
        %720 = vmatprep.subr.mxu0 0.0
        %721 = vmatpush1.msra.mxu0 0.0
        %722 = vmatprep.subr.mxu0 0.0
        %723 = vmatpush1.msra.mxu0 0.0
        %724 = vmatprep.subr.mxu0 0.0
        %725 = vmatpush1.msra.mxu0 0.0
        %726 = vmatprep.subr.mxu0 0.0
        %727 = vmatpush1.msra.mxu0 0.0
        %728 = vmatprep.subr.mxu0 0.0
        %729 = vmatpush1.msra.mxu0 0.0
        %730 = vmatprep.subr.mxu0 0.0
        %731 = vmatpush1.msra.mxu0 0.0
        %732 = vmatprep.subr.mxu0 0.0
        %733 = vmatpush1.msra.mxu0 0.0
        %734 = vmatprep.subr.mxu0 0.0
        %735 = vmatpush1.msra.mxu0 0.0
        %736 = vmatprep.subr.mxu0 0.0
        %737 = vmatpush1.msra.mxu0 0.0
        %738 = vmatprep.subr.mxu0 0.0
        %739 = vmatpush1.msra.mxu0 0.0
        %740 = vmatprep.subr.mxu0 0.0
        %741 = vmatpush1.msra.mxu0 0.0
        %742 = vmatprep.subr.mxu0 0.0
        %743 = vmatpush1.msra.mxu0 0.0
        %744 = vmatprep.subr.mxu0 0.0
        %745 = vmatpush1.msra.mxu0 0.0
        %746 = vmatprep.subr.mxu0 0.0
        %747 = vmatpush1.msra.mxu0 0.0
        %748 = vmatprep.subr.mxu0 0.0
        %749 = vmatpush1.msra.mxu0 0.0
        %750 = vmatprep.subr.mxu0 0.0
        %751 = vmatpush1.msra.mxu0 0.0
        %752 = vmatprep.mubr.f32.mxu0 0.0
        %753 = vmatmul.mubr.f32.gmra.mrb[0].mxu0 %v686
        %v754 = vpop.f32.mrb[0].mxu0
        %v755 = vadd.f32 0.0, %v754
        %v756 = vpop.f32.mrb[0].mxu0
        %757 = vdwg.mxu0
        %758 = vmatprep.subr.mxu0 0.0
        %759 = vmatpush1.msra.mxu0 %v683
        %760 = vmatprep.subr.mxu0 0.0
        %761 = vmatpush1.msra.mxu0 0.0
        %762 = vmatprep.subr.mxu0 0.0
        %763 = vmatpush1.msra.mxu0 0.0
        %764 = vmatprep.subr.mxu0 0.0
        %765 = vmatpush1.msra.mxu0 0.0
        %766 = vmatprep.subr.mxu0 0.0
        %767 = vmatpush1.msra.mxu0 0.0
        %768 = vmatprep.subr.mxu0 0.0
        %769 = vmatpush1.msra.mxu0 0.0
        %770 = vmatprep.subr.mxu0 0.0
        %771 = vmatpush1.msra.mxu0 0.0
        %772 = vmatprep.subr.mxu0 0.0
        %773 = vmatpush1.msra.mxu0 0.0
        %774 = vmatprep.subr.mxu0 0.0
        %775 = vmatpush1.msra.mxu0 0.0
        %776 = vmatprep.subr.mxu0 0.0
        %777 = vmatpush1.msra.mxu0 0.0
        %778 = vmatprep.subr.mxu0 0.0
        %779 = vmatpush1.msra.mxu0 0.0
        %780 = vmatprep.subr.mxu0 0.0
        %781 = vmatpush1.msra.mxu0 0.0
        %782 = vmatprep.subr.mxu0 0.0
        %783 = vmatpush1.msra.mxu0 0.0
        %784 = vmatprep.subr.mxu0 0.0
        %785 = vmatpush1.msra.mxu0 0.0
        %786 = vmatprep.subr.mxu0 0.0
        %787 = vmatpush1.msra.mxu0 0.0
        %788 = vmatprep.subr.mxu0 0.0
        %789 = vmatpush1.msra.mxu0 0.0
        %790 = vmatprep.subr.mxu0 0.0
        %791 = vmatpush1.msra.mxu0 0.0
        %792 = vmatprep.subr.mxu0 0.0
        %793 = vmatpush1.msra.mxu0 0.0
        %794 = vmatprep.subr.mxu0 0.0
        %795 = vmatpush1.msra.mxu0 0.0
        %796 = vmatprep.subr.mxu0 0.0
        %797 = vmatpush1.msra.mxu0 0.0
        %798 = vmatprep.subr.mxu0 0.0
        %799 = vmatpush1.msra.mxu0 0.0
        %800 = vmatprep.subr.mxu0 0.0
        %801 = vmatpush1.msra.mxu0 0.0
        %802 = vmatprep.subr.mxu0 0.0
        %803 = vmatpush1.msra.mxu0 0.0
        %804 = vmatprep.subr.mxu0 0.0
        %805 = vmatpush1.msra.mxu0 0.0
        %806 = vmatprep.subr.mxu0 0.0
        %807 = vmatpush1.msra.mxu0 0.0
        %808 = vmatprep.subr.mxu0 0.0
        %809 = vmatpush1.msra.mxu0 0.0
        %810 = vmatprep.subr.mxu0 0.0
        %811 = vmatpush1.msra.mxu0 0.0
        %812 = vmatprep.subr.mxu0 0.0
        %813 = vmatpush1.msra.mxu0 0.0
        %814 = vmatprep.subr.mxu0 0.0
        %815 = vmatpush1.msra.mxu0 0.0
        %816 = vmatprep.subr.mxu0 0.0
        %817 = vmatpush1.msra.mxu0 0.0
        %818 = vmatprep.subr.mxu0 0.0
        %819 = vmatpush1.msra.mxu0 0.0
        %820 = vmatprep.subr.mxu0 0.0
        %821 = vmatpush1.msra.mxu0 0.0
        %822 = vmatprep.mubr.f32.mxu0 0.0
        %823 = vmatmul.mubr.f32.gmra.mrb[0].mxu0 %v686
        %v824 = vpop.f32.mrb[0].mxu0
        %v825 = vadd.f32 0.0, %v824
        %v826 = vpop.f32.mrb[0].mxu0
        %827 = vdwg.mxu0
        %v828 = vadd.f32 %v477, %v755
        %v829 = vadd.f32 %v478, %v825
        %v830 = vsel %vm483, %v828, 0.0
        %831 = vadd.xlane.f32.xlu0 %v830
        %v832 = vpop.xlane.xlu0 %831
        %v833 = vsel %vm483, %v829, 0.0
        %834 = vadd.xlane.f32.xlu0 %v833
        %v835 = vpop.xlane.xlu0 %834
        %v836 = vmul.f32 %v832, %v490
        %v837 = vmul.f32 %v835, %v490
        %v838 = vmul.f32 %v828, %v828
        %v839 = vmul.f32 %v829, %v829
        %v840 = vsel %vm483, %v838, 0.0
        %841 = vadd.xlane.f32.xlu0 %v840
        %v842 = vpop.xlane.xlu0 %841
        %v843 = vsel %vm483, %v839, 0.0
        %844 = vadd.xlane.f32.xlu0 %v843
        %v845 = vpop.xlane.xlu0 %844
        %v846 = vmul.f32 %v842, %v490
        %v847 = vmul.f32 %v845, %v490
        %v848 = vmul.f32 %v836, %v836
        %v849 = vmul.f32 %v837, %v837
        %v850 = vsub.f32 %v846, %v848
        %v851 = vsub.f32 %v847, %v849
        %v852 = vmax.f32 %v850, 0.0
        %v853 = vmax.f32 %v851, 0.0
        %v854 = vsub.f32 %v828, %v836
        %v855 = vsub.f32 %v829, %v837
        %v856 = vadd.f32 %v852, 1e-05
        %v857 = vadd.f32 %v853, 1e-05
        %v858 = vrsqrt.pop %v856
        %v859 = vrsqrt.pop %v857
        %v860 = vmul.f32 %v854, %v858
        %v861 = vmul.f32 %v855, %v859
        %v862 = vlaneseq
        %v863 = vshrl.u32 %v862, 7
        %v864 = vsub.s32 0, %v863
        %v865 = vrot.slane %v481, %v864
        %v866 = vmul.f32 %v865, %v860
        %v867 = vmul.f32 %v865, %v861
        %v868 = vlaneseq
        %v869 = vshrl.u32 %v868, 7
        %v870 = vsub.s32 0, %v869
        %v871 = vrot.slane %v482, %v870
        %v872 = vadd.f32 %v866, %v871
        %v873 = vadd.f32 %v867, %v871
        %v874 = vld [vmem:[%s452] sm:$0xff]
        %v875 = vld [vmem:[%s452 + $0x8] sm:$0xff]
        %v876 = vld [vmem:[%s452 + $0x10] sm:$0xff]
        %v877 = vld [vmem:[%s452 + $0x18] sm:$0xff]
        %v879 = vsel %vm483, %v872, 0
        %v882 = vsel %vm483, %v873, 0
        %884 = vmatprep.subr.mxu0 0.0
        %885 = vmatpush1.msra.mxu0 %v874
        %886 = vmatprep.subr.mxu0 0.0
        %887 = vmatpush1.msra.mxu0 %v875
        %888 = vmatprep.subr.mxu0 0.0
        %889 = vmatpush1.msra.mxu0 %v876
        %890 = vmatprep.subr.mxu0 0.0
        %891 = vmatpush1.msra.mxu0 %v877
        %892 = vmatprep.subr.mxu0 0.0
        %893 = vmatpush1.msra.mxu0 0.0
        %894 = vmatprep.subr.mxu0 0.0
        %895 = vmatpush1.msra.mxu0 0.0
        %896 = vmatprep.subr.mxu0 0.0
        %897 = vmatpush1.msra.mxu0 0.0
        %898 = vmatprep.subr.mxu0 0.0
        %899 = vmatpush1.msra.mxu0 0.0
        %900 = vmatprep.subr.mxu0 0.0
        %901 = vmatpush1.msra.mxu0 0.0
        %902 = vmatprep.subr.mxu0 0.0
        %903 = vmatpush1.msra.mxu0 0.0
        %904 = vmatprep.subr.mxu0 0.0
        %905 = vmatpush1.msra.mxu0 0.0
        %906 = vmatprep.subr.mxu0 0.0
        %907 = vmatpush1.msra.mxu0 0.0
        %908 = vmatprep.subr.mxu0 0.0
        %909 = vmatpush1.msra.mxu0 0.0
        %910 = vmatprep.subr.mxu0 0.0
        %911 = vmatpush1.msra.mxu0 0.0
        %912 = vmatprep.subr.mxu0 0.0
        %913 = vmatpush1.msra.mxu0 0.0
        %914 = vmatprep.subr.mxu0 0.0
        %915 = vmatpush1.msra.mxu0 0.0
        %916 = vmatprep.subr.mxu0 0.0
        %917 = vmatpush1.msra.mxu0 0.0
        %918 = vmatprep.subr.mxu0 0.0
        %919 = vmatpush1.msra.mxu0 0.0
        %920 = vmatprep.subr.mxu0 0.0
        %921 = vmatpush1.msra.mxu0 0.0
        %922 = vmatprep.subr.mxu0 0.0
        %923 = vmatpush1.msra.mxu0 0.0
        %924 = vmatprep.subr.mxu0 0.0
        %925 = vmatpush1.msra.mxu0 0.0
        %926 = vmatprep.subr.mxu0 0.0
        %927 = vmatpush1.msra.mxu0 0.0
        %928 = vmatprep.subr.mxu0 0.0
        %929 = vmatpush1.msra.mxu0 0.0
        %930 = vmatprep.subr.mxu0 0.0
        %931 = vmatpush1.msra.mxu0 0.0
        %932 = vmatprep.subr.mxu0 0.0
        %933 = vmatpush1.msra.mxu0 0.0
        %934 = vmatprep.subr.mxu0 0.0
        %935 = vmatpush1.msra.mxu0 0.0
        %936 = vmatprep.subr.mxu0 0.0
        %937 = vmatpush1.msra.mxu0 0.0
        %938 = vmatprep.subr.mxu0 0.0
        %939 = vmatpush1.msra.mxu0 0.0
        %940 = vmatprep.subr.mxu0 0.0
        %941 = vmatpush1.msra.mxu0 0.0
        %942 = vmatprep.subr.mxu0 0.0
        %943 = vmatpush1.msra.mxu0 0.0
        %944 = vmatprep.subr.mxu0 0.0
        %945 = vmatpush1.msra.mxu0 0.0
        %946 = vmatprep.subr.mxu0 0.0
        %947 = vmatpush1.msra.mxu0 0.0
        %948 = vmatprep.mubr.f32.mxu0 0.0
        %949 = vmatmul.mubr.f32.gmra.mrb[0].mxu0 %v879
        %v950 = vpop.f32.mrb[0].mxu0
        %v951 = vadd.f32 0.0, %v950
        %v952 = vpop.f32.mrb[0].mxu0
        %953 = vmatprep.mubr.f32.mxu0 0.0
        %954 = vmatmul.mubr.f32.gmra.mrb[0].mxu0 %v882
        %v955 = vpop.f32.mrb[0].mxu0
        %v956 = vadd.f32 0.0, %v955
        %v957 = vpop.f32.mrb[0].mxu0
        %958 = vdwg.mxu0
        %v959 = vmul.f32 %v951, 0.5
        %v960 = vmul.f32 %v956, 0.5
        %v961 = vmul.f32 %v951, 0.70710677
        %v962 = vmul.f32 %v956, 0.70710677
        %v963 = verf.f32.pop %v961
        %v964 = verf.f32.pop %v962
        %v965 = vadd.f32 %v963, 1.0
        %v966 = vadd.f32 %v964, 1.0
        %v967 = vmul.f32 %v959, %v965
        %v968 = vmul.f32 %v960, %v966
        %v969 = vld [vmem:[%s463] sm:$0xff]
        %v970 = vld [vmem:[%s463 + $0x8] sm:$0xff]
        %vm971 = vcmask 130048
        %v973 = vsel %vm971, %v967, 0
        %v976 = vsel %vm971, %v968, 0
        %978 = vmatprep.subr.mxu0 0.0
        %979 = vmatpush1.msra.mxu0 %v969
        %980 = vmatprep.subr.mxu0 0.0
        %981 = vmatpush1.msra.mxu0 %v970
        %982 = vmatprep.subr.mxu0 0.0
        %983 = vmatpush1.msra.mxu0 0.0
        %984 = vmatprep.subr.mxu0 0.0
        %985 = vmatpush1.msra.mxu0 0.0
        %986 = vmatprep.subr.mxu0 0.0
        %987 = vmatpush1.msra.mxu0 0.0
        %988 = vmatprep.subr.mxu0 0.0
        %989 = vmatpush1.msra.mxu0 0.0
        %990 = vmatprep.subr.mxu0 0.0
        %991 = vmatpush1.msra.mxu0 0.0
        %992 = vmatprep.subr.mxu0 0.0
        %993 = vmatpush1.msra.mxu0 0.0
        %994 = vmatprep.subr.mxu0 0.0
        %995 = vmatpush1.msra.mxu0 0.0
        %996 = vmatprep.subr.mxu0 0.0
        %997 = vmatpush1.msra.mxu0 0.0
        %998 = vmatprep.subr.mxu0 0.0
        %999 = vmatpush1.msra.mxu0 0.0
        %1000 = vmatprep.subr.mxu0 0.0
        %1001 = vmatpush1.msra.mxu0 0.0
        %1002 = vmatprep.subr.mxu0 0.0
        %1003 = vmatpush1.msra.mxu0 0.0
        %1004 = vmatprep.subr.mxu0 0.0
        %1005 = vmatpush1.msra.mxu0 0.0
        %1006 = vmatprep.subr.mxu0 0.0
        %1007 = vmatpush1.msra.mxu0 0.0
        %1008 = vmatprep.subr.mxu0 0.0
        %1009 = vmatpush1.msra.mxu0 0.0
        %1010 = vmatprep.subr.mxu0 0.0
        %1011 = vmatpush1.msra.mxu0 0.0
        %1012 = vmatprep.subr.mxu0 0.0
        %1013 = vmatpush1.msra.mxu0 0.0
        %1014 = vmatprep.subr.mxu0 0.0
        %1015 = vmatpush1.msra.mxu0 0.0
        %1016 = vmatprep.subr.mxu0 0.0
        %1017 = vmatpush1.msra.mxu0 0.0
        %1018 = vmatprep.subr.mxu0 0.0
        %1019 = vmatpush1.msra.mxu0 0.0
        %1020 = vmatprep.subr.mxu0 0.0
        %1021 = vmatpush1.msra.mxu0 0.0
        %1022 = vmatprep.subr.mxu0 0.0
        %1023 = vmatpush1.msra.mxu0 0.0
        %1024 = vmatprep.subr.mxu0 0.0
        %1025 = vmatpush1.msra.mxu0 0.0
        %1026 = vmatprep.subr.mxu0 0.0
        %1027 = vmatpush1.msra.mxu0 0.0
        %1028 = vmatprep.subr.mxu0 0.0
        %1029 = vmatpush1.msra.mxu0 0.0
        %1030 = vmatprep.subr.mxu0 0.0
        %1031 = vmatpush1.msra.mxu0 0.0
        %1032 = vmatprep.subr.mxu0 0.0
        %1033 = vmatpush1.msra.mxu0 0.0
        %1034 = vmatprep.subr.mxu0 0.0
        %1035 = vmatpush1.msra.mxu0 0.0
        %1036 = vmatprep.subr.mxu0 0.0
        %1037 = vmatpush1.msra.mxu0 0.0
        %1038 = vmatprep.subr.mxu0 0.0
        %1039 = vmatpush1.msra.mxu0 0.0
        %1040 = vmatprep.subr.mxu0 0.0
        %1041 = vmatpush1.msra.mxu0 0.0
        %1042 = vmatprep.mubr.f32.mxu0 0.0
        %1043 = vmatmul.mubr.f32.gmra.mrb[0].mxu0 %v973
        %v1044 = vpop.f32.mrb[0].mxu0
        %v1045 = vadd.f32 0.0, %v1044
        %v1046 = vpop.f32.mrb[0].mxu0
        %1047 = vmatprep.mubr.f32.mxu0 0.0
        %1048 = vmatmul.mubr.f32.gmra.mrb[0].mxu0 %v976
        %v1049 = vpop.f32.mrb[0].mxu0
        %v1050 = vadd.f32 0.0, %v1049
        %v1051 = vpop.f32.mrb[0].mxu0
        %1052 = vdwg.mxu0
        %v1053 = vadd.f32 %v828, %v1045
        %v1054 = vadd.f32 %v829, %v1050
        %1055 = vst.msk [vmem:[#allocation2] sm:$0xff] %vm483, %v1053
        %1056 = vst.msk [vmem:[#allocation2 + $0x8] sm:$0xff] %vm483, %v1054
        %1057 = vst.msk [vmem:[%s408] sm:$0xff] %vm483, %v1053
        %1058 = vst.msk [vmem:[%s408 + $0x8] sm:$0xff] %vm483, %v1054
        %s1059 = sand.u32 %s233, 1
        %s1060 = scalar_lea.sflag [#allocation6], %s1059
        %s1061 = sand.u32 %s233, 1
        %s1062 = smul.addr %s1061, 16
        %s1063 = scalar_lea.vmem [#allocation5], %s1062
        // Predicated region
        $region49: #{tpu_custom_call.1} parent=43 // pred_check
          %p1064 = pneg %p243
        $region50: #{tpu_custom_call.1} parent=43 // pred_check_branch
          %1066 = sbr.rel (%p1064) target = $region52
        $region51: #{tpu_custom_call.1} parent=43 // pred_region
          %s1067 = smul.u32 2, %s31
          %s1069 = ssub.s32 256, 256
          %1070 = vsyncadd %s1060, %s1069
          %s1071 = smul.addr %s1067, 128
          %s1072 = scalar_lea.hbm %s7, %s1071
          %s1073 = sshll.u32 %s1063, 4
          %s1074 = int_to_ptr.vmem [resolvable:$true] %s1073
          %1079 = dma.vmem_to_hbm [thread:$0]  %s1074, 256, %s1072, %s1060, 128, 128, 8
        $region52: #{tpu_custom_call.1} parent=43 // pred_fallthru
          _
      $region44: #{tpu_custom_call.1} parent=5 // pred_fallthru
        _
      %p1080 = scmp.le.s32.totalorder 2, %s22
      // Predicated region
      $region53: #{tpu_custom_call.1} parent=5 // pred_check
        %p1081 = pneg %p1080
      $region54: #{tpu_custom_call.1} parent=5 // pred_check_branch
        %1083 = sbr.rel (%p1081) target = $region56
      $region55: #{tpu_custom_call.1} parent=5 // pred_region
        %s1084 = ssub.s32 %s22, 2
        // Predicated region
        $region57: #{tpu_custom_call.1} parent=55 // pred_check
          %p1085 = pneg %p249
        $region58: #{tpu_custom_call.1} parent=55 // pred_check_branch
          %1087 = sbr.rel (%p1085) target = $region60
        $region59: #{tpu_custom_call.1} parent=55 // pred_region
          %s1088 = sand.u32 %s234, 1
          %s1089 = scalar_lea.sflag [#allocation6], %s1088
          %s1090 = sand.u32 %s234, 1
          %s1091 = smul.addr %s1090, 16
          %s1092 = scalar_lea.vmem [#allocation5], %s1091
          %1093 = dma.done %s1089, 256
        $region60: #{tpu_custom_call.1} parent=55 // pred_fallthru
          _
      $region56: #{tpu_custom_call.1} parent=5 // pred_fallthru
        _
    $region6: #{tpu_custom_call.1} parent=1 // loop_footer
      %s26 = sadd.s32 1, %s22
    $region7: #{tpu_custom_call.1} parent=1 // loop_footer_branch
      %21 = sbr.rel target = $region3
    $region8: #{tpu_custom_call.1} parent=1 // loop_exit
      _
    %1094 = vsyncpa [#allocation6], 1
    %s1095 = scalar_lea.sflag [#allocation6], 1
    %1096 = vsyncpa %s1095, 1

</llo_original>
